<compile_context>
chip_gen: v7x
topology: tpu7x:2x2x1
jax: 0.10.0
libtpu: 0.0.40
codegen_flags: <defaults>
</compile_context>

<pallas_src>
import jax
import jax.numpy as jnp
from jax import lax
from jax.experimental import pallas as pl
from jax.experimental.pallas import tpu as pltpu


def _decoder_kernel(x_ref, wih_ref, whh_ref, b_ref, wout_ref, bout_ref,
                    out_ref, xg_scr, hs_scr):
    """x_ref: (T, Bp, E) time-major inputs.

    wih_ref: (E, 4*Hp)  gate-packed W_ih^T   (gate order i,f,o,g; each gate padded to Hp)
    whh_ref: (Hp, 4*Hp) gate-packed W_hh^T   (rows H: padded with zeros)
    b_ref:   (1, 4*Hp)  gate-packed b_ih+b_hh
    wout_ref:(Hp, tn)   hidden2tag W^T tile for this grid step
    bout_ref:(1, tn)    hidden2tag bias tile
    out_ref: (T*Bp, tn) logits tile
    """
    T, Bp, _ = x_ref.shape
    Hp = whh_ref.shape[0]

    # ---- Recurrence: only on the first vocab-tile grid step; hidden states persist ----
    @pl.when(pl.program_id(0) == 0)
    def _recurrence():
        # Input projection hoisted off the serial chain: one big MXU call, bias folded in.
        x2d = x_ref[...].reshape(T * Bp, -1)                      # (T*Bp, E)
        xg = (jnp.dot(x2d, wih_ref[...], preferred_element_type=jnp.float32)
              + b_ref[...])                                        # (T*Bp, 4*Hp)
        xg_scr[...] = xg.reshape(T, Bp, 4 * Hp)

        w_hh = whh_ref[...]                                        # loop-invariant

        def step(t, carry):
            h_prev, c_prev = carry
            # Only the h-dependent matmul stays on the recurrent critical path.
            gates = xg_scr[t] + jnp.dot(h_prev, w_hh,
                                        preferred_element_type=jnp.float32)  # (Bp, 4*Hp)
            # Gate blocks pre-ordered (i, f, o, g), each a full 128-lane block:
            # 2 EUP pushes per step, all slices vreg-aligned (no cross-lane relayout).
            sig = jax.nn.sigmoid(gates[:, :3 * Hp])
            g_t = jnp.tanh(gates[:, 3 * Hp:])
            i_g = sig[:, 0 * Hp:1 * Hp]
            f_g = sig[:, 1 * Hp:2 * Hp]
            o_g = sig[:, 2 * Hp:3 * Hp]
            c_new = f_g * c_prev + i_g * g_t
            h_new = o_g * jnp.tanh(c_new)
            hs_scr[t] = h_new
            return h_new, c_new

        # PyTorch nn.LSTM default: zero initial hidden / cell state.
        h0 = jnp.zeros((Bp, Hp), jnp.float32)
        c0 = jnp.zeros((Bp, Hp), jnp.float32)
        # Full unroll only for short sequences; partial unroll for production lengths.
        lax.fori_loop(0, T, step, (h0, c0), unroll=(True if T <= 16 else 4))

    # ---- hidden2tag projection for this vocab tile: one MXU call, lane-dense store ----
    hs2d = hs_scr[...].reshape(T * Bp, Hp)
    out_ref[...] = (jnp.dot(hs2d, wout_ref[...], preferred_element_type=jnp.float32)
                    + bout_ref[...]).astype(out_ref.dtype)


def _round_up(x, m):
    return -(-x // m) * m


def _pack_gate_cols(w, H, Hp):
    """w: (4H, X) rows in PyTorch gate order (i, f, g, o).

    Returns (X, 4*Hp): columns reordered to (i, f, o, g), each gate zero-padded to Hp.
    """
    wi, wf, wg, wo = jnp.split(w.astype(jnp.float32), 4, axis=0)   # each (H, X)

    def pad_t(m):
        return jnp.pad(m.T, ((0, 0), (0, Hp - H)))                 # (X, Hp)

    return jnp.concatenate([pad_t(wi), pad_t(wf), pad_t(wo), pad_t(wg)], axis=1)


def _pack_gate_bias(b, H, Hp):
    """b: (4H,) in gate order (i, f, g, o) -> (1, 4*Hp) in order (i, f, o, g), padded."""
    bi, bf, bg, bo = jnp.split(b.astype(jnp.float32), 4)

    def pad1(v):
        return jnp.pad(v, (0, Hp - H))

    return jnp.concatenate([pad1(bi), pad1(bf), pad1(bo), pad1(bg)]).reshape(1, 4 * Hp)


def decoder_rnn_forward(features, captions, params):
    """features: (B, E) float32; captions: (B, L) int32.

    Returns tag_space: (B, L, V) float32 — same semantics as the PyTorch module.
    """
    embed_w = params["embed_w"]                    # (V, E)
    wih, whh = params["w_ih"], params["w_hh"]      # (4H, E), (4H, H)
    bih, bhh = params["b_ih"], params["b_hh"]      # (4H,), (4H,)
    wout, bout = params["w_out"], params["b_out"]  # (V, H), (V,)

    B, E = features.shape
    V, H = wout.shape

    # Glue (plain JAX): embedding gather + concat of the image feature, time-major.
    embed_captions = jnp.take(embed_w, captions[:, :-1], axis=0)              # (B, L-1, E)
    inputs = jnp.concatenate([features[:, None, :], embed_captions], axis=1)  # (B, T, E)
    inputs = jnp.transpose(inputs, (1, 0, 2)).astype(jnp.float32)             # (T, B, E)
    T = inputs.shape[0]

    # Padding policy: batch -> f32 sublane granularity (8); per-gate hidden width and the
    # vocab -> full 128-lane multiples so every elementwise slice / store is lane-dense.
    Bp = _round_up(max(B, 8), 8)
    Hp = _round_up(H, 128)                  # per-gate lane-padded width
    Vp = _round_up(V, 128)
    tn = Vp if Vp <= 512 else 512           # vocab tile width (lanes)
    Vp = _round_up(Vp, tn)
    n_vt = Vp // tn

    if Bp != B:
        inputs = jnp.pad(inputs, ((0, 0), (0, Bp - B), (0, 0)))

    # Gate-packed, pre-transposed, lane-padded weights; the two LSTM biases pre-summed.
    w_ih_p = _pack_gate_cols(wih, H, Hp)                            # (E, 4*Hp)
    w_hh_p = jnp.pad(_pack_gate_cols(whh, H, Hp),
                     ((0, Hp - H), (0, 0)))                         # (Hp, 4*Hp)
    b_p = _pack_gate_bias(bih + bhh, H, Hp)                         # (1, 4*Hp)
    w_out_p = jnp.pad(jnp.transpose(wout).astype(jnp.float32),
                      ((0, Hp - H), (0, Vp - V)))                   # (Hp, Vp)
    b_out_p = jnp.pad(bout.astype(jnp.float32).reshape(1, V),
                      ((0, 0), (0, Vp - V)))                        # (1, Vp)

    out2d = pl.pallas_call(
        _decoder_kernel,
        out_shape=jax.ShapeDtypeStruct((T * Bp, Vp), jnp.float32),
        grid_spec=pltpu.PrefetchScalarGridSpec(
            num_scalar_prefetch=0,
            grid=(n_vt,),                                           # vocab tiles
            in_specs=[
                pl.BlockSpec((T, Bp, E), lambda j: (0, 0, 0)),      # inputs (time-major)
                pl.BlockSpec((E, 4 * Hp), lambda j: (0, 0)),        # W_ih^T (gate-packed)
                pl.BlockSpec((Hp, 4 * Hp), lambda j: (0, 0)),       # W_hh^T (gate-packed)
                pl.BlockSpec((1, 4 * Hp), lambda j: (0, 0)),        # b_ih + b_hh
                pl.BlockSpec((Hp, tn), lambda j: (0, j)),           # hidden2tag W^T tile
                pl.BlockSpec((1, tn), lambda j: (0, j)),            # hidden2tag b tile
            ],
            out_specs=pl.BlockSpec((T * Bp, tn), lambda j: (0, j)),
            scratch_shapes=[
                pltpu.VMEM((T, Bp, 4 * Hp), jnp.float32),           # precomputed x-gates
                pltpu.VMEM((T, Bp, Hp), jnp.float32),               # all hidden states
            ],
        ),
        compiler_params=pltpu.CompilerParams(
            # "arbitrary": hidden states from grid step 0 persist in scratch across the
            # V tiles, so this axis must execute sequentially on one core.
            dimension_semantics=("arbitrary",),
        ),
    )(inputs, w_ih_p, w_hh_p, b_p, w_out_p, b_out_p)

    # (T*Bp, Vp) -> (T, Bp, Vp) -> strip padding -> (B, T, V)
    out = out2d.reshape(T, Bp, Vp)[:, :B, :V]
    return jnp.transpose(out, (1, 0, 2))


def _reference_forward(features, captions, params):
    """Pure-JAX reference (lax.scan LSTM) for correctness checking."""
    embed_w = params["embed_w"]
    wih, whh = params["w_ih"], params["w_hh"]
    bih, bhh = params["b_ih"], params["b_hh"]
    wout, bout = params["w_out"], params["b_out"]

    B = features.shape[0]
    H = whh.shape[1]
    embed_captions = jnp.take(embed_w, captions[:, :-1], axis=0)
    inputs = jnp.concatenate([features[:, None, :], embed_captions], axis=1)
    inputs = jnp.transpose(inputs, (1, 0, 2)).astype(jnp.float32)

    def step(carry, x_t):
        h, c = carry
        gates = x_t @ wih.T + bih + h @ whh.T + bhh
        i_g, f_g, g_g, o_g = jnp.split(gates, 4, axis=-1)
        i_g = jax.nn.sigmoid(i_g)
        f_g = jax.nn.sigmoid(f_g)
        g_g = jnp.tanh(g_g)
        o_g = jax.nn.sigmoid(o_g)
        c = f_g * c + i_g * g_g
        h = o_g * jnp.tanh(c)
        return (h, c), h

    h0 = jnp.zeros((B, H), jnp.float32)
    c0 = jnp.zeros((B, H), jnp.float32)
    _, hs = lax.scan(step, (h0, c0), inputs)
    tag = hs @ wout.T + bout                    # (T, B, V)
    return jnp.transpose(tag, (1, 0, 2))        # (B, T, V)


def init_params(key, embed_size, hidden_size, vocab_size):
    ks = jax.random.split(key, 7)
    s_lstm = 1.0 / jnp.sqrt(hidden_size)
    s_lin = 1.0 / jnp.sqrt(hidden_size)
    return {
        "embed_w": jax.random.normal(ks[0], (vocab_size, embed_size), jnp.float32),
        "w_ih": jax.random.uniform(ks[1], (4 * hidden_size, embed_size),
                                   jnp.float32, -s_lstm, s_lstm),
        "w_hh": jax.random.uniform(ks[2], (4 * hidden_size, hidden_size),
                                   jnp.float32, -s_lstm, s_lstm),
        "b_ih": jax.random.uniform(ks[3], (4 * hidden_size,),
                                   jnp.float32, -s_lstm, s_lstm),
        "b_hh": jax.random.uniform(ks[4], (4 * hidden_size,),
                                   jnp.float32, -s_lstm, s_lstm),
        "w_out": jax.random.uniform(ks[5], (vocab_size, hidden_size),
                                    jnp.float32, -s_lin, s_lin),
        "b_out": jax.random.uniform(ks[6], (vocab_size,),
                                    jnp.float32, -s_lin, s_lin),
    }


if __name__ == "__main__":
    embed_size = 32
    hidden_size = 32
    vocab_size = 40
    batch = 2
    caption_len = 8   # LSTM sequence length = caption_len (1 feature + 7 caption embeddings)

    key = jax.random.PRNGKey(0)
    k_p, k_f, k_c = jax.random.split(key, 3)
    params = init_params(k_p, embed_size, hidden_size, vocab_size)

    features = jax.random.normal(k_f, (batch, embed_size), jnp.float32)
    captions = jax.random.randint(k_c, (batch, caption_len), 0, vocab_size, jnp.int32)

    out = decoder_rnn_forward(features, captions, params)
    out = jax.block_until_ready(out)

    ref = _reference_forward(features, captions, params)
    assert out.shape == (batch, caption_len, vocab_size), out.shape
    assert jnp.allclose(out, ref, atol=1e-4, rtol=1e-4), "mismatch vs reference"

    print("KERNEL_OK")
</pallas_src>

<mosaic_0001>
module attributes {stable_mosaic.version = 11 : i64} {
  func.func @_decoder_kernel(%arg0: i32, %arg1: memref<8x8x32xf32, #tpu.memory_space<vmem>>, %arg2: memref<32x512xf32, #tpu.memory_space<vmem>>, %arg3: memref<128x512xf32, #tpu.memory_space<vmem>>, %arg4: memref<1x512xf32, #tpu.memory_space<vmem>>, %arg5: memref<128x128xf32, #tpu.memory_space<vmem>>, %arg6: memref<1x128xf32, #tpu.memory_space<vmem>>, %arg7: memref<64x128xf32, #tpu.memory_space<vmem>>, %arg8: memref<8x8x512xf32, #tpu.memory_space<vmem>>, %arg9: memref<8x8x128xf32, #tpu.memory_space<vmem>>) attributes {dimension_semantics = [#tpu.dimension_semantics<arbitrary>], iteration_bounds = array<i64: 1>, scalar_prefetch = 0 : i64, scratch_operands = 2 : i64, tpu.core_type = #tpu.core_type<tc>, window_params = [{pipeline_mode = #tpu.pipeline_mode<synchronous>, transform_indices = @transform_0, window_bounds = array<i64: 8, 8, 32>}, {pipeline_mode = #tpu.pipeline_mode<synchronous>, transform_indices = @transform_1, window_bounds = array<i64: 32, 512>}, {pipeline_mode = #tpu.pipeline_mode<synchronous>, transform_indices = @transform_2, window_bounds = array<i64: 128, 512>}, {pipeline_mode = #tpu.pipeline_mode<synchronous>, transform_indices = @transform_3, window_bounds = array<i64: 1, 512>}, {transform_indices = @transform_4, window_bounds = array<i64: 128, 128>}, {transform_indices = @transform_5, window_bounds = array<i64: 1, 128>}, {transform_indices = @transform_6, window_bounds = array<i64: 64, 128>}]} {
    %c0_i32 = arith.constant 0 : i32
    %0 = arith.cmpi eq, %arg0, %c0_i32 : i32
    %1 = arith.extui %0 : i1 to i32
    %c0_i32_0 = arith.constant 0 : i32
    %2 = arith.cmpi ne, %1, %c0_i32_0 : i32
    scf.if %2 {
      %c0_9 = arith.constant 0 : index
      %c0_10 = arith.constant 0 : index
      %c0_11 = arith.constant 0 : index
      %11 = vector.load %arg1[%c0_9, %c0_10, %c0_11] : memref<8x8x32xf32, #tpu.memory_space<vmem>>, vector<8x8x32xf32>
      %12 = vector.shape_cast %11 : vector<8x8x32xf32> to vector<64x32xf32>
      %c0_12 = arith.constant 0 : index
      %c0_13 = arith.constant 0 : index
      %13 = vector.load %arg2[%c0_12, %c0_13] : memref<32x512xf32, #tpu.memory_space<vmem>>, vector<32x512xf32>
      %cst_14 = arith.constant dense<0.000000e+00> : vector<64x512xf32>
      %14 = tpu.matmul %12, %13, %cst_14 {dimension_numbers = #tpu.dot_dimension_numbers<[1], [0], [0], [1], [0, 0, 1, 1], [], []>} : vector<64x32xf32>, vector<32x512xf32>, vector<64x512xf32> -> vector<64x512xf32>
      %c0_15 = arith.constant 0 : index
      %c0_16 = arith.constant 0 : index
      %15 = vector.load %arg4[%c0_15, %c0_16] : memref<1x512xf32, #tpu.memory_space<vmem>>, vector<1x512xf32>
      %16 = vector.broadcast %15 : vector<1x512xf32> to vector<64x512xf32>
      %17 = arith.addf %14, %16 : vector<64x512xf32>
      %18 = vector.shape_cast %17 : vector<64x512xf32> to vector<8x8x512xf32>
      %c0_17 = arith.constant 0 : index
      %c0_18 = arith.constant 0 : index
      %c0_19 = arith.constant 0 : index
      %19 = vector.load %arg8[%c0_17, %c0_18, %c0_19] : memref<8x8x512xf32, #tpu.memory_space<vmem>>, vector<8x8x512xf32>
      tpu.vector_store %arg8[%c0_17, %c0_18, %c0_19], %18 {strides = array<i32>} : memref<8x8x512xf32, #tpu.memory_space<vmem>>, vector<8x8x512xf32>,
      %c0_20 = arith.constant 0 : index
      %c0_21 = arith.constant 0 : index
      %20 = vector.load %arg3[%c0_20, %c0_21] : memref<128x512xf32, #tpu.memory_space<vmem>>, vector<128x512xf32>
      %cst_22 = arith.constant 0.000000e+00 : f32
      %21 = vector.broadcast %cst_22 : f32 to vector<8x128xf32>
      %cst_23 = arith.constant 0.000000e+00 : f32
      %22 = vector.broadcast %cst_23 : f32 to vector<8x128xf32>
      %c0_i32_24 = arith.constant 0 : i32
      %23 = arith.index_cast %c0_i32_24 : i32 to index
      %c0_25 = arith.constant 0 : index
      %c0_26 = arith.constant 0 : index
      %24 = vector.load %arg8[%23, %c0_25, %c0_26] : memref<8x8x512xf32, #tpu.memory_space<vmem>>, vector<1x8x512xf32>
      %25 = vector.shape_cast %24 : vector<1x8x512xf32> to vector<8x512xf32>
      %cst_27 = arith.constant dense<0.000000e+00> : vector<8x512xf32>
      %26 = tpu.matmul %21, %20, %cst_27 {dimension_numbers = #tpu.dot_dimension_numbers<[1], [0], [0], [1], [0, 0, 1, 1], [], []>} : vector<8x128xf32>, vector<128x512xf32>, vector<8x512xf32> -> vector<8x512xf32>
      %27 = arith.addf %25, %26 : vector<8x512xf32>
      %28 = vector.extract_strided_slice %27 {offsets = [0, 0], sizes = [8, 384], strides = [1, 1]} : vector<8x512xf32> to vector<8x384xf32>
      %29 = arith.negf %28 : vector<8x384xf32>
      %30 = math.exp %29 : vector<8x384xf32>
      %cst_28 = arith.constant 1.000000e+00 : f32
      %31 = vector.broadcast %cst_28 : f32 to vector<8x384xf32>
      %32 = arith.addf %31, %30 : vector<8x384xf32>
      %33 = arith.divf %31, %32 : vector<8x384xf32>
      %34 = vector.extract_strided_slice %27 {offsets = [0, 384], sizes = [8, 128], strides = [1, 1]} : vector<8x512xf32> to vector<8x128xf32>
      %35 = math.tanh %34 : vector<8x128xf32>
      %36 = vector.extract_strided_slice %33 {offsets = [0, 0], sizes = [8, 128], strides = [1, 1]} : vector<8x384xf32> to vector<8x128xf32>
      %37 = vector.extract_strided_slice %33 {offsets = [0, 128], sizes = [8, 128], strides = [1, 1]} : vector<8x384xf32> to vector<8x128xf32>
      %38 = vector.extract_strided_slice %33 {offsets = [0, 256], sizes = [8, 128], strides = [1, 1]} : vector<8x384xf32> to vector<8x128xf32>
      %39 = arith.mulf %37, %22 : vector<8x128xf32>
      %40 = arith.mulf %36, %35 : vector<8x128xf32>
      %41 = arith.addf %39, %40 : vector<8x128xf32>
      %42 = math.tanh %41 : vector<8x128xf32>
      %43 = arith.mulf %38, %42 : vector<8x128xf32>
      %44 = arith.index_cast %c0_i32_24 : i32 to index
      %c0_29 = arith.constant 0 : index
      %c0_30 = arith.constant 0 : index
      %45 = vector.load %arg9[%44, %c0_29, %c0_30] : memref<8x8x128xf32, #tpu.memory_space<vmem>>, vector<1x8x128xf32>
      %46 = vector.shape_cast %45 : vector<1x8x128xf32> to vector<8x128xf32>
      %47 = vector.shape_cast %43 : vector<8x128xf32> to vector<1x8x128xf32>
      tpu.vector_store %arg9[%44, %c0_29, %c0_30], %47 {strides = array<i32>} : memref<8x8x128xf32, #tpu.memory_space<vmem>>, vector<1x8x128xf32>,
      %c1_i32 = arith.constant 1 : i32
      %48 = arith.index_cast %c1_i32 : i32 to index
      %c0_31 = arith.constant 0 : index
      %c0_32 = arith.constant 0 : index
      %49 = vector.load %arg8[%48, %c0_31, %c0_32] : memref<8x8x512xf32, #tpu.memory_space<vmem>>, vector<1x8x512xf32>
      %50 = vector.shape_cast %49 : vector<1x8x512xf32> to vector<8x512xf32>
      %cst_33 = arith.constant dense<0.000000e+00> : vector<8x512xf32>
      %51 = tpu.matmul %43, %20, %cst_33 {dimension_numbers = #tpu.dot_dimension_numbers<[1], [0], [0], [1], [0, 0, 1, 1], [], []>} : vector<8x128xf32>, vector<128x512xf32>, vector<8x512xf32> -> vector<8x512xf32>
      %52 = arith.addf %50, %51 : vector<8x512xf32>
      %53 = vector.extract_strided_slice %52 {offsets = [0, 0], sizes = [8, 384], strides = [1, 1]} : vector<8x512xf32> to vector<8x384xf32>
      %54 = arith.negf %53 : vector<8x384xf32>
      %55 = math.exp %54 : vector<8x384xf32>
      %cst_34 = arith.constant 1.000000e+00 : f32
      %56 = vector.broadcast %cst_34 : f32 to vector<8x384xf32>
      %57 = arith.addf %56, %55 : vector<8x384xf32>
      %58 = arith.divf %56, %57 : vector<8x384xf32>
      %59 = vector.extract_strided_slice %52 {offsets = [0, 384], sizes = [8, 128], strides = [1, 1]} : vector<8x512xf32> to vector<8x128xf32>
      %60 = math.tanh %59 : vector<8x128xf32>
      %61 = vector.extract_strided_slice %58 {offsets = [0, 0], sizes = [8, 128], strides = [1, 1]} : vector<8x384xf32> to vector<8x128xf32>
      %62 = vector.extract_strided_slice %58 {offsets = [0, 128], sizes = [8, 128], strides = [1, 1]} : vector<8x384xf32> to vector<8x128xf32>
      %63 = vector.extract_strided_slice %58 {offsets = [0, 256], sizes = [8, 128], strides = [1, 1]} : vector<8x384xf32> to vector<8x128xf32>
      %64 = arith.mulf %62, %41 : vector<8x128xf32>
      %65 = arith.mulf %61, %60 : vector<8x128xf32>
      %66 = arith.addf %64, %65 : vector<8x128xf32>
      %67 = math.tanh %66 : vector<8x128xf32>
      %68 = arith.mulf %63, %67 : vector<8x128xf32>
      %69 = arith.index_cast %c1_i32 : i32 to index
      %c0_35 = arith.constant 0 : index
      %c0_36 = arith.constant 0 : index
      %70 = vector.load %arg9[%69, %c0_35, %c0_36] : memref<8x8x128xf32, #tpu.memory_space<vmem>>, vector<1x8x128xf32>
      %71 = vector.shape_cast %70 : vector<1x8x128xf32> to vector<8x128xf32>
      %72 = vector.shape_cast %68 : vector<8x128xf32> to vector<1x8x128xf32>
      tpu.vector_store %arg9[%69, %c0_35, %c0_36], %72 {strides = array<i32>} : memref<8x8x128xf32, #tpu.memory_space<vmem>>, vector<1x8x128xf32>,
      %c2_i32 = arith.constant 2 : i32
      %73 = arith.index_cast %c2_i32 : i32 to index
      %c0_37 = arith.constant 0 : index
      %c0_38 = arith.constant 0 : index
      %74 = vector.load %arg8[%73, %c0_37, %c0_38] : memref<8x8x512xf32, #tpu.memory_space<vmem>>, vector<1x8x512xf32>
      %75 = vector.shape_cast %74 : vector<1x8x512xf32> to vector<8x512xf32>
      %cst_39 = arith.constant dense<0.000000e+00> : vector<8x512xf32>
      %76 = tpu.matmul %68, %20, %cst_39 {dimension_numbers = #tpu.dot_dimension_numbers<[1], [0], [0], [1], [0, 0, 1, 1], [], []>} : vector<8x128xf32>, vector<128x512xf32>, vector<8x512xf32> -> vector<8x512xf32>
      %77 = arith.addf %75, %76 : vector<8x512xf32>
      %78 = vector.extract_strided_slice %77 {offsets = [0, 0], sizes = [8, 384], strides = [1, 1]} : vector<8x512xf32> to vector<8x384xf32>
      %79 = arith.negf %78 : vector<8x384xf32>
      %80 = math.exp %79 : vector<8x384xf32>
      %cst_40 = arith.constant 1.000000e+00 : f32
      %81 = vector.broadcast %cst_40 : f32 to vector<8x384xf32>
      %82 = arith.addf %81, %80 : vector<8x384xf32>
      %83 = arith.divf %81, %82 : vector<8x384xf32>
      %84 = vector.extract_strided_slice %77 {offsets = [0, 384], sizes = [8, 128], strides = [1, 1]} : vector<8x512xf32> to vector<8x128xf32>
      %85 = math.tanh %84 : vector<8x128xf32>
      %86 = vector.extract_strided_slice %83 {offsets = [0, 0], sizes = [8, 128], strides = [1, 1]} : vector<8x384xf32> to vector<8x128xf32>
      %87 = vector.extract_strided_slice %83 {offsets = [0, 128], sizes = [8, 128], strides = [1, 1]} : vector<8x384xf32> to vector<8x128xf32>
      %88 = vector.extract_strided_slice %83 {offsets = [0, 256], sizes = [8, 128], strides = [1, 1]} : vector<8x384xf32> to vector<8x128xf32>
      %89 = arith.mulf %87, %66 : vector<8x128xf32>
      %90 = arith.mulf %86, %85 : vector<8x128xf32>
      %91 = arith.addf %89, %90 : vector<8x128xf32>
      %92 = math.tanh %91 : vector<8x128xf32>
      %93 = arith.mulf %88, %92 : vector<8x128xf32>
      %94 = arith.index_cast %c2_i32 : i32 to index
      %c0_41 = arith.constant 0 : index
      %c0_42 = arith.constant 0 : index
      %95 = vector.load %arg9[%94, %c0_41, %c0_42] : memref<8x8x128xf32, #tpu.memory_space<vmem>>, vector<1x8x128xf32>
      %96 = vector.shape_cast %95 : vector<1x8x128xf32> to vector<8x128xf32>
      %97 = vector.shape_cast %93 : vector<8x128xf32> to vector<1x8x128xf32>
      tpu.vector_store %arg9[%94, %c0_41, %c0_42], %97 {strides = array<i32>} : memref<8x8x128xf32, #tpu.memory_space<vmem>>, vector<1x8x128xf32>,
      %c3_i32 = arith.constant 3 : i32
      %98 = arith.index_cast %c3_i32 : i32 to index
      %c0_43 = arith.constant 0 : index
      %c0_44 = arith.constant 0 : index
      %99 = vector.load %arg8[%98, %c0_43, %c0_44] : memref<8x8x512xf32, #tpu.memory_space<vmem>>, vector<1x8x512xf32>
      %100 = vector.shape_cast %99 : vector<1x8x512xf32> to vector<8x512xf32>
      %cst_45 = arith.constant dense<0.000000e+00> : vector<8x512xf32>
      %101 = tpu.matmul %93, %20, %cst_45 {dimension_numbers = #tpu.dot_dimension_numbers<[1], [0], [0], [1], [0, 0, 1, 1], [], []>} : vector<8x128xf32>, vector<128x512xf32>, vector<8x512xf32> -> vector<8x512xf32>
      %102 = arith.addf %100, %101 : vector<8x512xf32>
      %103 = vector.extract_strided_slice %102 {offsets = [0, 0], sizes = [8, 384], strides = [1, 1]} : vector<8x512xf32> to vector<8x384xf32>
      %104 = arith.negf %103 : vector<8x384xf32>
      %105 = math.exp %104 : vector<8x384xf32>
      %cst_46 = arith.constant 1.000000e+00 : f32
      %106 = vector.broadcast %cst_46 : f32 to vector<8x384xf32>
      %107 = arith.addf %106, %105 : vector<8x384xf32>
      %108 = arith.divf %106, %107 : vector<8x384xf32>
      %109 = vector.extract_strided_slice %102 {offsets = [0, 384], sizes = [8, 128], strides = [1, 1]} : vector<8x512xf32> to vector<8x128xf32>
      %110 = math.tanh %109 : vector<8x128xf32>
      %111 = vector.extract_strided_slice %108 {offsets = [0, 0], sizes = [8, 128], strides = [1, 1]} : vector<8x384xf32> to vector<8x128xf32>
      %112 = vector.extract_strided_slice %108 {offsets = [0, 128], sizes = [8, 128], strides = [1, 1]} : vector<8x384xf32> to vector<8x128xf32>
      %113 = vector.extract_strided_slice %108 {offsets = [0, 256], sizes = [8, 128], strides = [1, 1]} : vector<8x384xf32> to vector<8x128xf32>
      %114 = arith.mulf %112, %91 : vector<8x128xf32>
      %115 = arith.mulf %111, %110 : vector<8x128xf32>
      %116 = arith.addf %114, %115 : vector<8x128xf32>
      %117 = math.tanh %116 : vector<8x128xf32>
      %118 = arith.mulf %113, %117 : vector<8x128xf32>
      %119 = arith.index_cast %c3_i32 : i32 to index
      %c0_47 = arith.constant 0 : index
      %c0_48 = arith.constant 0 : index
      %120 = vector.load %arg9[%119, %c0_47, %c0_48] : memref<8x8x128xf32, #tpu.memory_space<vmem>>, vector<1x8x128xf32>
      %121 = vector.shape_cast %120 : vector<1x8x128xf32> to vector<8x128xf32>
      %122 = vector.shape_cast %118 : vector<8x128xf32> to vector<1x8x128xf32>
      tpu.vector_store %arg9[%119, %c0_47, %c0_48], %122 {strides = array<i32>} : memref<8x8x128xf32, #tpu.memory_space<vmem>>, vector<1x8x128xf32>,
      %c4_i32 = arith.constant 4 : i32
      %123 = arith.index_cast %c4_i32 : i32 to index
      %c0_49 = arith.constant 0 : index
      %c0_50 = arith.constant 0 : index
      %124 = vector.load %arg8[%123, %c0_49, %c0_50] : memref<8x8x512xf32, #tpu.memory_space<vmem>>, vector<1x8x512xf32>
      %125 = vector.shape_cast %124 : vector<1x8x512xf32> to vector<8x512xf32>
      %cst_51 = arith.constant dense<0.000000e+00> : vector<8x512xf32>
      %126 = tpu.matmul %118, %20, %cst_51 {dimension_numbers = #tpu.dot_dimension_numbers<[1], [0], [0], [1], [0, 0, 1, 1], [], []>} : vector<8x128xf32>, vector<128x512xf32>, vector<8x512xf32> -> vector<8x512xf32>
      %127 = arith.addf %125, %126 : vector<8x512xf32>
      %128 = vector.extract_strided_slice %127 {offsets = [0, 0], sizes = [8, 384], strides = [1, 1]} : vector<8x512xf32> to vector<8x384xf32>
      %129 = arith.negf %128 : vector<8x384xf32>
      %130 = math.exp %129 : vector<8x384xf32>
      %cst_52 = arith.constant 1.000000e+00 : f32
      %131 = vector.broadcast %cst_52 : f32 to vector<8x384xf32>
      %132 = arith.addf %131, %130 : vector<8x384xf32>
      %133 = arith.divf %131, %132 : vector<8x384xf32>
      %134 = vector.extract_strided_slice %127 {offsets = [0, 384], sizes = [8, 128], strides = [1, 1]} : vector<8x512xf32> to vector<8x128xf32>
      %135 = math.tanh %134 : vector<8x128xf32>
      %136 = vector.extract_strided_slice %133 {offsets = [0, 0], sizes = [8, 128], strides = [1, 1]} : vector<8x384xf32> to vector<8x128xf32>
      %137 = vector.extract_strided_slice %133 {offsets = [0, 128], sizes = [8, 128], strides = [1, 1]} : vector<8x384xf32> to vector<8x128xf32>
      %138 = vector.extract_strided_slice %133 {offsets = [0, 256], sizes = [8, 128], strides = [1, 1]} : vector<8x384xf32> to vector<8x128xf32>
      %139 = arith.mulf %137, %116 : vector<8x128xf32>
      %140 = arith.mulf %136, %135 : vector<8x128xf32>
      %141 = arith.addf %139, %140 : vector<8x128xf32>
      %142 = math.tanh %141 : vector<8x128xf32>
      %143 = arith.mulf %138, %142 : vector<8x128xf32>
      %144 = arith.index_cast %c4_i32 : i32 to index
      %c0_53 = arith.constant 0 : index
      %c0_54 = arith.constant 0 : index
      %145 = vector.load %arg9[%144, %c0_53, %c0_54] : memref<8x8x128xf32, #tpu.memory_space<vmem>>, vector<1x8x128xf32>
      %146 = vector.shape_cast %145 : vector<1x8x128xf32> to vector<8x128xf32>
      %147 = vector.shape_cast %143 : vector<8x128xf32> to vector<1x8x128xf32>
      tpu.vector_store %arg9[%144, %c0_53, %c0_54], %147 {strides = array<i32>} : memref<8x8x128xf32, #tpu.memory_space<vmem>>, vector<1x8x128xf32>,
      %c5_i32 = arith.constant 5 : i32
      %148 = arith.index_cast %c5_i32 : i32 to index
      %c0_55 = arith.constant 0 : index
      %c0_56 = arith.constant 0 : index
      %149 = vector.load %arg8[%148, %c0_55, %c0_56] : memref<8x8x512xf32, #tpu.memory_space<vmem>>, vector<1x8x512xf32>
      %150 = vector.shape_cast %149 : vector<1x8x512xf32> to vector<8x512xf32>
      %cst_57 = arith.constant dense<0.000000e+00> : vector<8x512xf32>
      %151 = tpu.matmul %143, %20, %cst_57 {dimension_numbers = #tpu.dot_dimension_numbers<[1], [0], [0], [1], [0, 0, 1, 1], [], []>} : vector<8x128xf32>, vector<128x512xf32>, vector<8x512xf32> -> vector<8x512xf32>
      %152 = arith.addf %150, %151 : vector<8x512xf32>
      %153 = vector.extract_strided_slice %152 {offsets = [0, 0], sizes = [8, 384], strides = [1, 1]} : vector<8x512xf32> to vector<8x384xf32>
      %154 = arith.negf %153 : vector<8x384xf32>
      %155 = math.exp %154 : vector<8x384xf32>
      %cst_58 = arith.constant 1.000000e+00 : f32
      %156 = vector.broadcast %cst_58 : f32 to vector<8x384xf32>
      %157 = arith.addf %156, %155 : vector<8x384xf32>
      %158 = arith.divf %156, %157 : vector<8x384xf32>
      %159 = vector.extract_strided_slice %152 {offsets = [0, 384], sizes = [8, 128], strides = [1, 1]} : vector<8x512xf32> to vector<8x128xf32>
      %160 = math.tanh %159 : vector<8x128xf32>
      %161 = vector.extract_strided_slice %158 {offsets = [0, 0], sizes = [8, 128], strides = [1, 1]} : vector<8x384xf32> to vector<8x128xf32>
      %162 = vector.extract_strided_slice %158 {offsets = [0, 128], sizes = [8, 128], strides = [1, 1]} : vector<8x384xf32> to vector<8x128xf32>
      %163 = vector.extract_strided_slice %158 {offsets = [0, 256], sizes = [8, 128], strides = [1, 1]} : vector<8x384xf32> to vector<8x128xf32>
      %164 = arith.mulf %162, %141 : vector<8x128xf32>
      %165 = arith.mulf %161, %160 : vector<8x128xf32>
      %166 = arith.addf %164, %165 : vector<8x128xf32>
      %167 = math.tanh %166 : vector<8x128xf32>
      %168 = arith.mulf %163, %167 : vector<8x128xf32>
      %169 = arith.index_cast %c5_i32 : i32 to index
      %c0_59 = arith.constant 0 : index
      %c0_60 = arith.constant 0 : index
      %170 = vector.load %arg9[%169, %c0_59, %c0_60] : memref<8x8x128xf32, #tpu.memory_space<vmem>>, vector<1x8x128xf32>
      %171 = vector.shape_cast %170 : vector<1x8x128xf32> to vector<8x128xf32>
      %172 = vector.shape_cast %168 : vector<8x128xf32> to vector<1x8x128xf32>
      tpu.vector_store %arg9[%169, %c0_59, %c0_60], %172 {strides = array<i32>} : memref<8x8x128xf32, #tpu.memory_space<vmem>>, vector<1x8x128xf32>,
      %c6_i32 = arith.constant 6 : i32
      %173 = arith.index_cast %c6_i32 : i32 to index
      %c0_61 = arith.constant 0 : index
      %c0_62 = arith.constant 0 : index
      %174 = vector.load %arg8[%173, %c0_61, %c0_62] : memref<8x8x512xf32, #tpu.memory_space<vmem>>, vector<1x8x512xf32>
      %175 = vector.shape_cast %174 : vector<1x8x512xf32> to vector<8x512xf32>
      %cst_63 = arith.constant dense<0.000000e+00> : vector<8x512xf32>
      %176 = tpu.matmul %168, %20, %cst_63 {dimension_numbers = #tpu.dot_dimension_numbers<[1], [0], [0], [1], [0, 0, 1, 1], [], []>} : vector<8x128xf32>, vector<128x512xf32>, vector<8x512xf32> -> vector<8x512xf32>
      %177 = arith.addf %175, %176 : vector<8x512xf32>
      %178 = vector.extract_strided_slice %177 {offsets = [0, 0], sizes = [8, 384], strides = [1, 1]} : vector<8x512xf32> to vector<8x384xf32>
      %179 = arith.negf %178 : vector<8x384xf32>
      %180 = math.exp %179 : vector<8x384xf32>
      %cst_64 = arith.constant 1.000000e+00 : f32
      %181 = vector.broadcast %cst_64 : f32 to vector<8x384xf32>
      %182 = arith.addf %181, %180 : vector<8x384xf32>
      %183 = arith.divf %181, %182 : vector<8x384xf32>
      %184 = vector.extract_strided_slice %177 {offsets = [0, 384], sizes = [8, 128], strides = [1, 1]} : vector<8x512xf32> to vector<8x128xf32>
      %185 = math.tanh %184 : vector<8x128xf32>
      %186 = vector.extract_strided_slice %183 {offsets = [0, 0], sizes = [8, 128], strides = [1, 1]} : vector<8x384xf32> to vector<8x128xf32>
      %187 = vector.extract_strided_slice %183 {offsets = [0, 128], sizes = [8, 128], strides = [1, 1]} : vector<8x384xf32> to vector<8x128xf32>
      %188 = vector.extract_strided_slice %183 {offsets = [0, 256], sizes = [8, 128], strides = [1, 1]} : vector<8x384xf32> to vector<8x128xf32>
      %189 = arith.mulf %187, %166 : vector<8x128xf32>
      %190 = arith.mulf %186, %185 : vector<8x128xf32>
      %191 = arith.addf %189, %190 : vector<8x128xf32>
      %192 = math.tanh %191 : vector<8x128xf32>
      %193 = arith.mulf %188, %192 : vector<8x128xf32>
      %194 = arith.index_cast %c6_i32 : i32 to index
      %c0_65 = arith.constant 0 : index
      %c0_66 = arith.constant 0 : index
      %195 = vector.load %arg9[%194, %c0_65, %c0_66] : memref<8x8x128xf32, #tpu.memory_space<vmem>>, vector<1x8x128xf32>
      %196 = vector.shape_cast %195 : vector<1x8x128xf32> to vector<8x128xf32>
      %197 = vector.shape_cast %193 : vector<8x128xf32> to vector<1x8x128xf32>
      tpu.vector_store %arg9[%194, %c0_65, %c0_66], %197 {strides = array<i32>} : memref<8x8x128xf32, #tpu.memory_space<vmem>>, vector<1x8x128xf32>,
      %c7_i32 = arith.constant 7 : i32
      %198 = arith.index_cast %c7_i32 : i32 to index
      %c0_67 = arith.constant 0 : index
      %c0_68 = arith.constant 0 : index
      %199 = vector.load %arg8[%198, %c0_67, %c0_68] : memref<8x8x512xf32, #tpu.memory_space<vmem>>, vector<1x8x512xf32>
      %200 = vector.shape_cast %199 : vector<1x8x512xf32> to vector<8x512xf32>
      %cst_69 = arith.constant dense<0.000000e+00> : vector<8x512xf32>
      %201 = tpu.matmul %193, %20, %cst_69 {dimension_numbers = #tpu.dot_dimension_numbers<[1], [0], [0], [1], [0, 0, 1, 1], [], []>} : vector<8x128xf32>, vector<128x512xf32>, vector<8x512xf32> -> vector<8x512xf32>
      %202 = arith.addf %200, %201 : vector<8x512xf32>
      %203 = vector.extract_strided_slice %202 {offsets = [0, 0], sizes = [8, 384], strides = [1, 1]} : vector<8x512xf32> to vector<8x384xf32>
      %204 = arith.negf %203 : vector<8x384xf32>
      %205 = math.exp %204 : vector<8x384xf32>
      %cst_70 = arith.constant 1.000000e+00 : f32
      %206 = vector.broadcast %cst_70 : f32 to vector<8x384xf32>
      %207 = arith.addf %206, %205 : vector<8x384xf32>
      %208 = arith.divf %206, %207 : vector<8x384xf32>
      %209 = vector.extract_strided_slice %202 {offsets = [0, 384], sizes = [8, 128], strides = [1, 1]} : vector<8x512xf32> to vector<8x128xf32>
      %210 = math.tanh %209 : vector<8x128xf32>
      %211 = vector.extract_strided_slice %208 {offsets = [0, 0], sizes = [8, 128], strides = [1, 1]} : vector<8x384xf32> to vector<8x128xf32>
      %212 = vector.extract_strided_slice %208 {offsets = [0, 128], sizes = [8, 128], strides = [1, 1]} : vector<8x384xf32> to vector<8x128xf32>
      %213 = vector.extract_strided_slice %208 {offsets = [0, 256], sizes = [8, 128], strides = [1, 1]} : vector<8x384xf32> to vector<8x128xf32>
      %214 = arith.mulf %212, %191 : vector<8x128xf32>
      %215 = arith.mulf %211, %210 : vector<8x128xf32>
      %216 = arith.addf %214, %215 : vector<8x128xf32>
      %217 = math.tanh %216 : vector<8x128xf32>
      %218 = arith.mulf %213, %217 : vector<8x128xf32>
      %219 = arith.index_cast %c7_i32 : i32 to index
      %c0_71 = arith.constant 0 : index
      %c0_72 = arith.constant 0 : index
      %220 = vector.load %arg9[%219, %c0_71, %c0_72] : memref<8x8x128xf32, #tpu.memory_space<vmem>>, vector<1x8x128xf32>
      %221 = vector.shape_cast %220 : vector<1x8x128xf32> to vector<8x128xf32>
      %222 = vector.shape_cast %218 : vector<8x128xf32> to vector<1x8x128xf32>
      tpu.vector_store %arg9[%219, %c0_71, %c0_72], %222 {strides = array<i32>} : memref<8x8x128xf32, #tpu.memory_space<vmem>>, vector<1x8x128xf32>,
      %c8_i32 = arith.constant 8 : i32
    } else {
    }
    %c0 = arith.constant 0 : index
    %c0_1 = arith.constant 0 : index
    %c0_2 = arith.constant 0 : index
    %3 = vector.load %arg9[%c0, %c0_1, %c0_2] : memref<8x8x128xf32, #tpu.memory_space<vmem>>, vector<8x8x128xf32>
    %4 = vector.shape_cast %3 : vector<8x8x128xf32> to vector<64x128xf32>
    %c0_3 = arith.constant 0 : index
    %c0_4 = arith.constant 0 : index
    %5 = vector.load %arg5[%c0_3, %c0_4] : memref<128x128xf32, #tpu.memory_space<vmem>>, vector<128x128xf32>
    %cst = arith.constant dense<0.000000e+00> : vector<64x128xf32>
    %6 = tpu.matmul %4, %5, %cst {dimension_numbers = #tpu.dot_dimension_numbers<[1], [0], [0], [1], [0, 0, 1, 1], [], []>} : vector<64x128xf32>, vector<128x128xf32>, vector<64x128xf32> -> vector<64x128xf32>
    %c0_5 = arith.constant 0 : index
    %c0_6 = arith.constant 0 : index
    %7 = vector.load %arg6[%c0_5, %c0_6] : memref<1x128xf32, #tpu.memory_space<vmem>>, vector<1x128xf32>
    %8 = vector.broadcast %7 : vector<1x128xf32> to vector<64x128xf32>
    %9 = arith.addf %6, %8 : vector<64x128xf32>
    %c0_7 = arith.constant 0 : index
    %c0_8 = arith.constant 0 : index
    %10 = vector.load %arg7[%c0_7, %c0_8] : memref<64x128xf32, #tpu.memory_space<vmem>>, vector<64x128xf32>
    tpu.vector_store %arg7[%c0_7, %c0_8], %9 {strides = array<i32>} : memref<64x128xf32, #tpu.memory_space<vmem>>, vector<64x128xf32>,
    return
  }
  func.func @transform_0(%arg0: i32) -> (i32, i32, i32) {
    %c0_i32 = arith.constant 0 : i32
    %c0_i32_0 = arith.constant 0 : i32
    %c0_i32_1 = arith.constant 0 : i32
    %c0_i32_2 = arith.constant 0 : i32
    return %c0_i32, %c0_i32_0, %c0_i32_1 : i32, i32, i32
  }
  func.func @transform_1(%arg0: i32) -> (i32, i32) {
    %c0_i32 = arith.constant 0 : i32
    %c0_i32_0 = arith.constant 0 : i32
    %c0_i32_1 = arith.constant 0 : i32
    return %c0_i32, %c0_i32_0 : i32, i32
  }
  func.func @transform_2(%arg0: i32) -> (i32, i32) {
    %c0_i32 = arith.constant 0 : i32
    %c0_i32_0 = arith.constant 0 : i32
    %c0_i32_1 = arith.constant 0 : i32
    return %c0_i32, %c0_i32_0 : i32, i32
  }
  func.func @transform_3(%arg0: i32) -> (i32, i32) {
    %c0_i32 = arith.constant 0 : i32
    %c0_i32_0 = arith.constant 0 : i32
    %c0_i32_1 = arith.constant 0 : i32
    return %c0_i32, %c0_i32_0 : i32, i32
  }
  func.func @transform_4(%arg0: i32) -> (i32, i32) {
    %c0_i32 = arith.constant 0 : i32
    %c0_i32_0 = arith.constant 0 : i32
    return %c0_i32, %arg0 : i32, i32
  }
  func.func @transform_5(%arg0: i32) -> (i32, i32) {
    %c0_i32 = arith.constant 0 : i32
    %c0_i32_0 = arith.constant 0 : i32
    return %c0_i32, %arg0 : i32, i32
  }
  func.func @transform_6(%arg0: i32) -> (i32, i32) {
    %c0_i32 = arith.constant 0 : i32
    %c0_i32_0 = arith.constant 0 : i32
    return %c0_i32, %arg0 : i32, i32
  }
}

</mosaic_0001>

<llo_original>
// kernel: tpu_custom_call.1
$region0: #{tpu_custom_call.1}
  #allocation0 [shape = 'u32[]', space=smem, size = 0x4, offset = 0x4, fixed_abs, tag = 'smem constant byte address 0x4 - core index']
  #allocation1 [shape = 'u32[144,128]{1,0:T(1,128)}', space=vmem, size = 0x12000, scoped, tag = 'internal scratch']
  #allocation2 [shape = 'f32[8,8,512]{2,1,0:T(8,128)}', space=vmem, size = 0x20000, scoped, tag = 'scratch operand']
  #allocation3 [shape = 'f32[8,8,128]{2,1,0:T(8,128)}', space=vmem, size = 0x8000, scoped, tag = 'scratch operand']
  %s0 = inlined_call_operand.hbm [shape: f32[8,8,32], index: 0, kind: input, shape index: {}]
  %s1 = inlined_call_operand.hbm [shape: f32[32,512], index: 1, kind: input, shape index: {}]
  %s2 = inlined_call_operand.hbm [shape: f32[128,512], index: 2, kind: input, shape index: {}]
  %s3 = inlined_call_operand.vmem [shape: f32[1,512], index: 3, kind: input, shape index: {}]
  %s4 = inlined_call_operand.hbm [shape: f32[128,128], index: 4, kind: input, shape index: {}]
  %s5 = inlined_call_operand.vmem [shape: f32[1,128], index: 5, kind: input, shape index: {}]
  %s6 = inlined_call_operand.hbm [shape: f32[64,128], index: 6, kind: output, shape index: {}]
  %s7 = sld [smem:[#allocation0]]
  $region54: #{tpu_custom_call.1} parent=0
    _
  %s9 = ssub.s32 1, %s7
  %s10 = scalar_select 0, %s9, %s7
  $region1: #{tpu_custom_call.1} parent=0
    #allocation4 [shape = 'u8[32768]{0}', space=vmem, size = 0x8000, scoped, tag = 'input window, operand 0, single buffered']
    #allocation5 [shape = 's32[1]{0}', space=sflag, size = 0x4, scoped, tag = 'scoped memory for tpu_custom_call.1']
    #allocation6 [shape = 's32[1]{0}', space=sflag, size = 0x4, scoped, tag = 'scoped memory for tpu_custom_call.1']
    #allocation7 [shape = 'u8[65536]{0}', space=vmem, size = 0x10000, scoped, tag = 'input window, operand 1, single buffered']
    #allocation8 [shape = 's32[1]{0}', space=sflag, size = 0x4, scoped, tag = 'scoped memory for tpu_custom_call.1']
    #allocation9 [shape = 'u8[262144]{0}', space=vmem, size = 0x40000, scoped, tag = 'input window, operand 2, single buffered']
    #allocation10 [shape = 'u8[65536]{0}', space=vmem, size = 0x10000, scoped, tag = 'input window, operand 4, single buffered']
    #allocation11 [shape = 's32[1]{0}', space=sflag, size = 0x4, scoped, tag = 'scoped memory for tpu_custom_call.1']
    #allocation12 [shape = 'u8[32768]{0}', space=vmem, size = 0x8000, scoped, tag = 'output window, operand 0, single buffered']
    %11 = vsyncpa [#allocation5], 0
    %12 = vsyncpa [#allocation8], 0
    %13 = vsyncpa [#allocation11], 0
    %14 = vsyncpa [#allocation6], 0
    // Predicated region
    $region2: #{tpu_custom_call.1} parent=1 // pred_check
      _
    $region3: #{tpu_custom_call.1} parent=1 // pred_check_branch
      %16 = sbr.rel (0) target = $region5
    $region4: #{tpu_custom_call.1} parent=1 // pred_region
      %s18 = ssub.s32 1024, 1024
      %19 = vsyncadd [#allocation5], %s18
      %s20 = sshll.u32 [#allocation4], 4
      %s21 = int_to_ptr.vmem [resolvable:$true] %s20
      %26 = dma.hbm_to_vmem [thread:$0]  %s0, 1024, %s21, [#allocation5], 128, 128, 8
    $region5: #{tpu_custom_call.1} parent=1 // pred_fallthru
      _
    // Predicated region
    $region6: #{tpu_custom_call.1} parent=1 // pred_check
      _
    $region7: #{tpu_custom_call.1} parent=1 // pred_check_branch
      %28 = sbr.rel (0) target = $region9
    $region8: #{tpu_custom_call.1} parent=1 // pred_region
      %s30 = ssub.s32 2048, 2048
      %31 = vsyncadd [#allocation8], %s30
      %s32 = sshll.u32 [#allocation7], 4
      %s33 = int_to_ptr.vmem [resolvable:$true] %s32
      %38 = dma.hbm_to_vmem [thread:$0]  %s1, 2048, %s33, [#allocation8], 512, 512, 32
    $region9: #{tpu_custom_call.1} parent=1 // pred_fallthru
      _
    // Predicated region
    $region10: #{tpu_custom_call.1} parent=1 // pred_check
      _
    $region11: #{tpu_custom_call.1} parent=1 // pred_check_branch
      %40 = sbr.rel (0) target = $region13
    $region12: #{tpu_custom_call.1} parent=1 // pred_region
      %s42 = ssub.s32 8192, 8192
      %43 = vsyncadd [#allocation8], %s42
      %s44 = sshll.u32 [#allocation9], 4
      %s45 = int_to_ptr.vmem [resolvable:$true] %s44
      %50 = dma.hbm_to_vmem [thread:$0]  %s2, 8192, %s45, [#allocation8], 512, 512, 32
    $region13: #{tpu_custom_call.1} parent=1 // pred_fallthru
      _
    // Predicated region
    $region14: #{tpu_custom_call.1} parent=1 // pred_check
      _
    $region15: #{tpu_custom_call.1} parent=1 // pred_check_branch
      %52 = sbr.rel (0) target = $region17
    $region16: #{tpu_custom_call.1} parent=1 // pred_region
      _
    $region17: #{tpu_custom_call.1} parent=1 // pred_fallthru
      _
    // Predicated region
    $region18: #{tpu_custom_call.1} parent=1 // pred_check
      _
    $region19: #{tpu_custom_call.1} parent=1 // pred_check_branch
      %54 = sbr.rel (0) target = $region21
    $region20: #{tpu_custom_call.1} parent=1 // pred_region
      %s56 = ssub.s32 2048, 2048
      %57 = vsyncadd [#allocation11], %s56
      %s58 = sshll.u32 [#allocation10], 4
      %s59 = int_to_ptr.vmem [resolvable:$true] %s58
      %64 = dma.hbm_to_vmem [thread:$0]  %s4, 2048, %s59, [#allocation11], 128, 128, 8
    $region21: #{tpu_custom_call.1} parent=1 // pred_fallthru
      _
    // Predicated region
    $region22: #{tpu_custom_call.1} parent=1 // pred_check
      _
    $region23: #{tpu_custom_call.1} parent=1 // pred_check_branch
      %66 = sbr.rel (0) target = $region25
    $region24: #{tpu_custom_call.1} parent=1 // pred_region
      _
    $region25: #{tpu_custom_call.1} parent=1 // pred_fallthru
      _
    // Predicated region
    $region26: #{tpu_custom_call.1} parent=1 // pred_check
      _
    $region27: #{tpu_custom_call.1} parent=1 // pred_check_branch
      %68 = sbr.rel (0) target = $region29
    $region28: #{tpu_custom_call.1} parent=1 // pred_region
      %69 = dma.done [#allocation5], 1024
    $region29: #{tpu_custom_call.1} parent=1 // pred_fallthru
      _
    // Predicated region
    $region30: #{tpu_custom_call.1} parent=1 // pred_check
      _
    $region31: #{tpu_custom_call.1} parent=1 // pred_check_branch
      %71 = sbr.rel (0) target = $region33
    $region32: #{tpu_custom_call.1} parent=1 // pred_region
      %72 = dma.done [#allocation8], 2048
    $region33: #{tpu_custom_call.1} parent=1 // pred_fallthru
      _
    // Predicated region
    $region34: #{tpu_custom_call.1} parent=1 // pred_check
      _
    $region35: #{tpu_custom_call.1} parent=1 // pred_check_branch
      %74 = sbr.rel (0) target = $region37
    $region36: #{tpu_custom_call.1} parent=1 // pred_region
      %75 = dma.done [#allocation8], 8192
    $region37: #{tpu_custom_call.1} parent=1 // pred_fallthru
      _
    // Predicated region
    $region38: #{tpu_custom_call.1} parent=1 // pred_check
      _
    $region39: #{tpu_custom_call.1} parent=1 // pred_check_branch
      %77 = sbr.rel (0) target = $region41
    $region40: #{tpu_custom_call.1} parent=1 // pred_region
      %78 = dma.done [#allocation11], 2048
    $region41: #{tpu_custom_call.1} parent=1 // pred_fallthru
      _
    %p79 = scmp.eq.s32.totalorder 0, 0
    // Predicated region
    $region42: #{tpu_custom_call.1} parent=1 // pred_check
      %p80 = pneg %p79
    $region43: #{tpu_custom_call.1} parent=1 // pred_check_branch
      %82 = sbr.rel (%p80) target = $region45
    $region44: #{tpu_custom_call.1} parent=1 // pred_region
      %v83 = vld [vmem:[#allocation4] sm:$0xff]
      %v84 = vld [vmem:[#allocation4 + $0x8] sm:$0xff]
      %v85 = vld [vmem:[#allocation4 + $0x10] sm:$0xff]
      %v86 = vld [vmem:[#allocation4 + $0x18] sm:$0xff]
      %v87 = vld [vmem:[#allocation4 + $0x20] sm:$0xff]
      %v88 = vld [vmem:[#allocation4 + $0x28] sm:$0xff]
      %v89 = vld [vmem:[#allocation4 + $0x30] sm:$0xff]
      %v90 = vld [vmem:[#allocation4 + $0x38] sm:$0xff]
      %v91 = vld [vmem:[#allocation7] sm:$0xff]
      %v92 = vld [vmem:[#allocation7 + $0x8] sm:$0xff]
      %v93 = vld [vmem:[#allocation7 + $0x10] sm:$0xff]
      %v94 = vld [vmem:[#allocation7 + $0x18] sm:$0xff]
      %v95 = vld [vmem:[#allocation7 + $0x20] sm:$0xff]
      %v96 = vld [vmem:[#allocation7 + $0x28] sm:$0xff]
      %v97 = vld [vmem:[#allocation7 + $0x30] sm:$0xff]
      %v98 = vld [vmem:[#allocation7 + $0x38] sm:$0xff]
      %v99 = vld [vmem:[#allocation7 + $0x40] sm:$0xff]
      %v100 = vld [vmem:[#allocation7 + $0x48] sm:$0xff]
      %v101 = vld [vmem:[#allocation7 + $0x50] sm:$0xff]
      %v102 = vld [vmem:[#allocation7 + $0x58] sm:$0xff]
      %v103 = vld [vmem:[#allocation7 + $0x60] sm:$0xff]
      %v104 = vld [vmem:[#allocation7 + $0x68] sm:$0xff]
      %v105 = vld [vmem:[#allocation7 + $0x70] sm:$0xff]
      %v106 = vld [vmem:[#allocation7 + $0x78] sm:$0xff]
      %v107 = vld [vmem:[%s3] sm:$0xf]
      %v109 = vlaneseq
      %v110 = vshrl.u32 %v109, 7
      %v111 = vsub.s32 0, %v110
      %v112 = vrot.slane %v107, %v111
      %v113 = vlaneseq
      %v114 = vshrl.u32 %v113, 7
      %v115 = vsub.s32 1, %v114
      %v116 = vrot.slane %v107, %v115
      %v117 = vlaneseq
      %v118 = vshrl.u32 %v117, 7
      %v119 = vsub.s32 2, %v118
      %v120 = vrot.slane %v107, %v119
      %v121 = vlaneseq
      %v122 = vshrl.u32 %v121, 7
      %v123 = vsub.s32 3, %v122
      %v124 = vrot.slane %v107, %v123
      %vm129 = vcmask 261120
      %v131 = vsel %vm129, %v83, 0
      %v134 = vsel %vm129, %v84, 0
      %v137 = vsel %vm129, %v85, 0
      %v140 = vsel %vm129, %v86, 0
      %v143 = vsel %vm129, %v87, 0
      %v146 = vsel %vm129, %v88, 0
      %v149 = vsel %vm129, %v89, 0
      %v152 = vsel %vm129, %v90, 0
      %154 = vmatprep.subr.mxu0 %v92
      %155 = vmatpush1.msra.mxu0 %v91
      %156 = vmatprep.subr.mxu0 %v96
      %157 = vmatpush1.msra.mxu0 %v95
      %158 = vmatprep.subr.mxu0 %v100
      %159 = vmatpush1.msra.mxu0 %v99
      %160 = vmatprep.subr.mxu0 %v104
      %161 = vmatpush1.msra.mxu0 %v103
      %162 = vmatprep.subr.mxu0 0.0
      %163 = vmatpush1.msra.mxu0 0.0
      %164 = vmatprep.subr.mxu0 0.0
      %165 = vmatpush1.msra.mxu0 0.0
      %166 = vmatprep.subr.mxu0 0.0
      %167 = vmatpush1.msra.mxu0 0.0
      %168 = vmatprep.subr.mxu0 0.0
      %169 = vmatpush1.msra.mxu0 0.0
      %170 = vmatprep.subr.mxu0 0.0
      %171 = vmatpush1.msra.mxu0 0.0
      %172 = vmatprep.subr.mxu0 0.0
      %173 = vmatpush1.msra.mxu0 0.0
      %174 = vmatprep.subr.mxu0 0.0
      %175 = vmatpush1.msra.mxu0 0.0
      %176 = vmatprep.subr.mxu0 0.0
      %177 = vmatpush1.msra.mxu0 0.0
      %178 = vmatprep.subr.mxu0 0.0
      %179 = vmatpush1.msra.mxu0 0.0
      %180 = vmatprep.subr.mxu0 0.0
      %181 = vmatpush1.msra.mxu0 0.0
      %182 = vmatprep.subr.mxu0 0.0
      %183 = vmatpush1.msra.mxu0 0.0
      %184 = vmatprep.subr.mxu0 0.0
      %185 = vmatpush1.msra.mxu0 0.0
      %186 = vmatprep.subr.mxu0 0.0
      %187 = vmatpush1.msra.mxu0 0.0
      %188 = vmatprep.subr.mxu0 0.0
      %189 = vmatpush1.msra.mxu0 0.0
      %190 = vmatprep.subr.mxu0 0.0
      %191 = vmatpush1.msra.mxu0 0.0
      %192 = vmatprep.subr.mxu0 0.0
      %193 = vmatpush1.msra.mxu0 0.0
      %194 = vmatprep.subr.mxu0 0.0
      %195 = vmatpush1.msra.mxu0 0.0
      %196 = vmatprep.subr.mxu0 0.0
      %197 = vmatpush1.msra.mxu0 0.0
      %198 = vmatprep.subr.mxu0 0.0
      %199 = vmatpush1.msra.mxu0 0.0
      %200 = vmatprep.subr.mxu0 0.0
      %201 = vmatpush1.msra.mxu0 0.0
      %202 = vmatprep.subr.mxu0 0.0
      %203 = vmatpush1.msra.mxu0 0.0
      %204 = vmatprep.subr.mxu0 0.0
      %205 = vmatpush1.msra.mxu0 0.0
      %206 = vmatprep.subr.mxu0 0.0
      %207 = vmatpush1.msra.mxu0 0.0
      %208 = vmatprep.subr.mxu0 0.0
      %209 = vmatpush1.msra.mxu0 0.0
      %210 = vmatprep.subr.mxu0 0.0
      %211 = vmatpush1.msra.mxu0 0.0
      %212 = vmatprep.subr.mxu0 0.0
      %213 = vmatpush1.msra.mxu0 0.0
      %214 = vmatprep.subr.mxu0 0.0
      %215 = vmatpush1.msra.mxu0 0.0
      %216 = vmatprep.subr.mxu0 0.0
      %217 = vmatpush1.msra.mxu0 0.0
      %218 = vmatprep.mubr.f32.mxu0 0.0
      %219 = vmatmul.mubr.f32.gmra.mrb[0].mxu0 %v131
      %v220 = vpop.f32.mrb[0].mxu0
      %v221 = vadd.f32 %v112, %v220
      %v222 = vpop.f32.mrb[0].mxu0
      %v223 = vadd.f32 %v116, %v222
      %224 = vmatprep.mubr.f32.mxu0 0.0
      %225 = vmatmul.mubr.f32.gmra.mrb[0].mxu0 %v134
      %v226 = vpop.f32.mrb[0].mxu0
      %v227 = vadd.f32 %v112, %v226
      %v228 = vpop.f32.mrb[0].mxu0
      %v229 = vadd.f32 %v116, %v228
      %230 = vmatprep.mubr.f32.mxu0 0.0
      %231 = vmatmul.mubr.f32.gmra.mrb[0].mxu0 %v137
      %v232 = vpop.f32.mrb[0].mxu0
      %v233 = vadd.f32 %v112, %v232
      %v234 = vpop.f32.mrb[0].mxu0
      %v235 = vadd.f32 %v116, %v234
      %236 = vmatprep.mubr.f32.mxu0 0.0
      %237 = vmatmul.mubr.f32.gmra.mrb[0].mxu0 %v140
      %v238 = vpop.f32.mrb[0].mxu0
      %v239 = vadd.f32 %v112, %v238
      %v240 = vpop.f32.mrb[0].mxu0
      %v241 = vadd.f32 %v116, %v240
      %242 = vmatprep.mubr.f32.mxu0 0.0
      %243 = vmatmul.mubr.f32.gmra.mrb[0].mxu0 %v143
      %v244 = vpop.f32.mrb[0].mxu0
      %v245 = vadd.f32 %v112, %v244
      %v246 = vpop.f32.mrb[0].mxu0
      %v247 = vadd.f32 %v116, %v246
      %248 = vmatprep.mubr.f32.mxu0 0.0
      %249 = vmatmul.mubr.f32.gmra.mrb[0].mxu0 %v146
      %v250 = vpop.f32.mrb[0].mxu0
      %v251 = vadd.f32 %v112, %v250
      %v252 = vpop.f32.mrb[0].mxu0
      %v253 = vadd.f32 %v116, %v252
      %254 = vmatprep.mubr.f32.mxu0 0.0
      %255 = vmatmul.mubr.f32.gmra.mrb[0].mxu0 %v149
      %v256 = vpop.f32.mrb[0].mxu0
      %v257 = vadd.f32 %v112, %v256
      %v258 = vpop.f32.mrb[0].mxu0
      %v259 = vadd.f32 %v116, %v258
      %260 = vmatprep.mubr.f32.mxu0 0.0
      %261 = vmatmul.mubr.f32.gmra.mrb[0].mxu0 %v152
      %v262 = vpop.f32.mrb[0].mxu0
      %v263 = vadd.f32 %v112, %v262
      %v264 = vpop.f32.mrb[0].mxu0
      %v265 = vadd.f32 %v116, %v264
      %266 = vdwg.mxu0
      %267 = vmatprep.subr.mxu0 %v94
      %268 = vmatpush1.msra.mxu0 %v93
      %269 = vmatprep.subr.mxu0 %v98
      %270 = vmatpush1.msra.mxu0 %v97
      %271 = vmatprep.subr.mxu0 %v102
      %272 = vmatpush1.msra.mxu0 %v101
      %273 = vmatprep.subr.mxu0 %v106
      %274 = vmatpush1.msra.mxu0 %v105
      %275 = vmatprep.subr.mxu0 0.0
      %276 = vmatpush1.msra.mxu0 0.0
      %277 = vmatprep.subr.mxu0 0.0
      %278 = vmatpush1.msra.mxu0 0.0
      %279 = vmatprep.subr.mxu0 0.0
      %280 = vmatpush1.msra.mxu0 0.0
      %281 = vmatprep.subr.mxu0 0.0
      %282 = vmatpush1.msra.mxu0 0.0
      %283 = vmatprep.subr.mxu0 0.0
      %284 = vmatpush1.msra.mxu0 0.0
      %285 = vmatprep.subr.mxu0 0.0
      %286 = vmatpush1.msra.mxu0 0.0
      %287 = vmatprep.subr.mxu0 0.0
      %288 = vmatpush1.msra.mxu0 0.0
      %289 = vmatprep.subr.mxu0 0.0
      %290 = vmatpush1.msra.mxu0 0.0
      %291 = vmatprep.subr.mxu0 0.0
      %292 = vmatpush1.msra.mxu0 0.0
      %293 = vmatprep.subr.mxu0 0.0
      %294 = vmatpush1.msra.mxu0 0.0
      %295 = vmatprep.subr.mxu0 0.0
      %296 = vmatpush1.msra.mxu0 0.0
      %297 = vmatprep.subr.mxu0 0.0
      %298 = vmatpush1.msra.mxu0 0.0
      %299 = vmatprep.subr.mxu0 0.0
      %300 = vmatpush1.msra.mxu0 0.0
      %301 = vmatprep.subr.mxu0 0.0
      %302 = vmatpush1.msra.mxu0 0.0
      %303 = vmatprep.subr.mxu0 0.0
      %304 = vmatpush1.msra.mxu0 0.0
      %305 = vmatprep.subr.mxu0 0.0
      %306 = vmatpush1.msra.mxu0 0.0
      %307 = vmatprep.subr.mxu0 0.0
      %308 = vmatpush1.msra.mxu0 0.0
      %309 = vmatprep.subr.mxu0 0.0
      %310 = vmatpush1.msra.mxu0 0.0
      %311 = vmatprep.subr.mxu0 0.0
      %312 = vmatpush1.msra.mxu0 0.0
      %313 = vmatprep.subr.mxu0 0.0
      %314 = vmatpush1.msra.mxu0 0.0
      %315 = vmatprep.subr.mxu0 0.0
      %316 = vmatpush1.msra.mxu0 0.0
      %317 = vmatprep.subr.mxu0 0.0
      %318 = vmatpush1.msra.mxu0 0.0
      %319 = vmatprep.subr.mxu0 0.0
      %320 = vmatpush1.msra.mxu0 0.0
      %321 = vmatprep.subr.mxu0 0.0
      %322 = vmatpush1.msra.mxu0 0.0
      %323 = vmatprep.subr.mxu0 0.0
      %324 = vmatpush1.msra.mxu0 0.0
      %325 = vmatprep.subr.mxu0 0.0
      %326 = vmatpush1.msra.mxu0 0.0
      %327 = vmatprep.subr.mxu0 0.0
      %328 = vmatpush1.msra.mxu0 0.0
      %329 = vmatprep.subr.mxu0 0.0
      %330 = vmatpush1.msra.mxu0 0.0
      %331 = vmatprep.mubr.f32.mxu0 0.0
      %332 = vmatmul.mubr.f32.gmra.mrb[0].mxu0 %v131
      %v333 = vpop.f32.mrb[0].mxu0
      %v334 = vadd.f32 %v120, %v333
      %v335 = vpop.f32.mrb[0].mxu0
      %v336 = vadd.f32 %v124, %v335
      %337 = vmatprep.mubr.f32.mxu0 0.0
      %338 = vmatmul.mubr.f32.gmra.mrb[0].mxu0 %v134
      %v339 = vpop.f32.mrb[0].mxu0
      %v340 = vadd.f32 %v120, %v339
      %v341 = vpop.f32.mrb[0].mxu0
      %v342 = vadd.f32 %v124, %v341
      %343 = vmatprep.mubr.f32.mxu0 0.0
      %344 = vmatmul.mubr.f32.gmra.mrb[0].mxu0 %v137
      %v345 = vpop.f32.mrb[0].mxu0
      %v346 = vadd.f32 %v120, %v345
      %v347 = vpop.f32.mrb[0].mxu0
      %v348 = vadd.f32 %v124, %v347
      %349 = vmatprep.mubr.f32.mxu0 0.0
      %350 = vmatmul.mubr.f32.gmra.mrb[0].mxu0 %v140
      %v351 = vpop.f32.mrb[0].mxu0
      %v352 = vadd.f32 %v120, %v351
      %v353 = vpop.f32.mrb[0].mxu0
      %v354 = vadd.f32 %v124, %v353
      %355 = vmatprep.mubr.f32.mxu0 0.0
      %356 = vmatmul.mubr.f32.gmra.mrb[0].mxu0 %v143
      %v357 = vpop.f32.mrb[0].mxu0
      %v358 = vadd.f32 %v120, %v357
      %v359 = vpop.f32.mrb[0].mxu0
      %v360 = vadd.f32 %v124, %v359
      %361 = vmatprep.mubr.f32.mxu0 0.0
      %362 = vmatmul.mubr.f32.gmra.mrb[0].mxu0 %v146
      %v363 = vpop.f32.mrb[0].mxu0
      %v364 = vadd.f32 %v120, %v363
      %v365 = vpop.f32.mrb[0].mxu0
      %v366 = vadd.f32 %v124, %v365
      %367 = vmatprep.mubr.f32.mxu0 0.0
      %368 = vmatmul.mubr.f32.gmra.mrb[0].mxu0 %v149
      %v369 = vpop.f32.mrb[0].mxu0
      %v370 = vadd.f32 %v120, %v369
      %v371 = vpop.f32.mrb[0].mxu0
      %v372 = vadd.f32 %v124, %v371
      %373 = vmatprep.mubr.f32.mxu0 0.0
      %374 = vmatmul.mubr.f32.gmra.mrb[0].mxu0 %v152
      %v375 = vpop.f32.mrb[0].mxu0
      %v376 = vadd.f32 %v120, %v375
      %v377 = vpop.f32.mrb[0].mxu0
      %v378 = vadd.f32 %v124, %v377
      %379 = vdwg.mxu0
      %380 = vst [vmem:[#allocation2] sm:$0xff] %v221
      %381 = vst [vmem:[#allocation2 + $0x8] sm:$0xff] %v223
      %382 = vst [vmem:[#allocation2 + $0x10] sm:$0xff] %v334
      %383 = vst [vmem:[#allocation2 + $0x18] sm:$0xff] %v336
      %384 = vst [vmem:[#allocation2 + $0x20] sm:$0xff] %v227
      %385 = vst [vmem:[#allocation2 + $0x28] sm:$0xff] %v229
      %386 = vst [vmem:[#allocation2 + $0x30] sm:$0xff] %v340
      %387 = vst [vmem:[#allocation2 + $0x38] sm:$0xff] %v342
      %388 = vst [vmem:[#allocation2 + $0x40] sm:$0xff] %v233
      %389 = vst [vmem:[#allocation2 + $0x48] sm:$0xff] %v235
      %390 = vst [vmem:[#allocation2 + $0x50] sm:$0xff] %v346
      %391 = vst [vmem:[#allocation2 + $0x58] sm:$0xff] %v348
      %392 = vst [vmem:[#allocation2 + $0x60] sm:$0xff] %v239
      %393 = vst [vmem:[#allocation2 + $0x68] sm:$0xff] %v241
      %394 = vst [vmem:[#allocation2 + $0x70] sm:$0xff] %v352
      %395 = vst [vmem:[#allocation2 + $0x78] sm:$0xff] %v354
      %396 = vst [vmem:[#allocation2 + $0x80] sm:$0xff] %v245
      %397 = vst [vmem:[#allocation2 + $0x88] sm:$0xff] %v247
      %398 = vst [vmem:[#allocation2 + $0x90] sm:$0xff] %v358
      %399 = vst [vmem:[#allocation2 + $0x98] sm:$0xff] %v360
      %400 = vst [vmem:[#allocation2 + $0xa0] sm:$0xff] %v251
      %401 = vst [vmem:[#allocation2 + $0xa8] sm:$0xff] %v253
      %402 = vst [vmem:[#allocation2 + $0xb0] sm:$0xff] %v364
      %403 = vst [vmem:[#allocation2 + $0xb8] sm:$0xff] %v366
      %404 = vst [vmem:[#allocation2 + $0xc0] sm:$0xff] %v257
      %405 = vst [vmem:[#allocation2 + $0xc8] sm:$0xff] %v259
      %406 = vst [vmem:[#allocation2 + $0xd0] sm:$0xff] %v370
      %407 = vst [vmem:[#allocation2 + $0xd8] sm:$0xff] %v372
      %408 = vst [vmem:[#allocation2 + $0xe0] sm:$0xff] %v263
      %409 = vst [vmem:[#allocation2 + $0xe8] sm:$0xff] %v265
      %410 = vst [vmem:[#allocation2 + $0xf0] sm:$0xff] %v376
      %411 = vst [vmem:[#allocation2 + $0xf8] sm:$0xff] %v378
      %v412 = vld [vmem:[#allocation9] sm:$0xff]
      %v413 = vld [vmem:[#allocation9 + $0x8] sm:$0xff]
      %v414 = vld [vmem:[#allocation9 + $0x10] sm:$0xff]
      %v415 = vld [vmem:[#allocation9 + $0x18] sm:$0xff]
      %v416 = vld [vmem:[#allocation9 + $0x20] sm:$0xff]
      %v417 = vld [vmem:[#allocation9 + $0x28] sm:$0xff]
      %v418 = vld [vmem:[#allocation9 + $0x30] sm:$0xff]
      %v419 = vld [vmem:[#allocation9 + $0x38] sm:$0xff]
      %v420 = vld [vmem:[#allocation9 + $0x40] sm:$0xff]
      %v421 = vld [vmem:[#allocation9 + $0x48] sm:$0xff]
      %v422 = vld [vmem:[#allocation9 + $0x50] sm:$0xff]
      %v423 = vld [vmem:[#allocation9 + $0x58] sm:$0xff]
      %v424 = vld [vmem:[#allocation9 + $0x60] sm:$0xff]
      %v425 = vld [vmem:[#allocation9 + $0x68] sm:$0xff]
      %v426 = vld [vmem:[#allocation9 + $0x70] sm:$0xff]
      %v427 = vld [vmem:[#allocation9 + $0x78] sm:$0xff]
      %v428 = vld [vmem:[#allocation9 + $0x80] sm:$0xff]
      %v429 = vld [vmem:[#allocation9 + $0x88] sm:$0xff]
      %v430 = vld [vmem:[#allocation9 + $0x90] sm:$0xff]
      %v431 = vld [vmem:[#allocation9 + $0x98] sm:$0xff]
      %v432 = vld [vmem:[#allocation9 + $0xa0] sm:$0xff]
      %v433 = vld [vmem:[#allocation9 + $0xa8] sm:$0xff]
      %v434 = vld [vmem:[#allocation9 + $0xb0] sm:$0xff]
      %v435 = vld [vmem:[#allocation9 + $0xb8] sm:$0xff]
      %v436 = vld [vmem:[#allocation9 + $0xc0] sm:$0xff]
      %v437 = vld [vmem:[#allocation9 + $0xc8] sm:$0xff]
      %v438 = vld [vmem:[#allocation9 + $0xd0] sm:$0xff]
      %v439 = vld [vmem:[#allocation9 + $0xd8] sm:$0xff]
      %v440 = vld [vmem:[#allocation9 + $0xe0] sm:$0xff]
      %v441 = vld [vmem:[#allocation9 + $0xe8] sm:$0xff]
      %v442 = vld [vmem:[#allocation9 + $0xf0] sm:$0xff]
      %v443 = vld [vmem:[#allocation9 + $0xf8] sm:$0xff]
      %v444 = vld [vmem:[#allocation9 + $0x100] sm:$0xff]
      %v445 = vld [vmem:[#allocation9 + $0x108] sm:$0xff]
      %v446 = vld [vmem:[#allocation9 + $0x110] sm:$0xff]
      %v447 = vld [vmem:[#allocation9 + $0x118] sm:$0xff]
      %v448 = vld [vmem:[#allocation9 + $0x120] sm:$0xff]
      %v449 = vld [vmem:[#allocation9 + $0x128] sm:$0xff]
      %v450 = vld [vmem:[#allocation9 + $0x130] sm:$0xff]
      %v451 = vld [vmem:[#allocation9 + $0x138] sm:$0xff]
      %v452 = vld [vmem:[#allocation9 + $0x140] sm:$0xff]
      %v453 = vld [vmem:[#allocation9 + $0x148] sm:$0xff]
      %v454 = vld [vmem:[#allocation9 + $0x150] sm:$0xff]
      %v455 = vld [vmem:[#allocation9 + $0x158] sm:$0xff]
      %v456 = vld [vmem:[#allocation9 + $0x160] sm:$0xff]
      %v457 = vld [vmem:[#allocation9 + $0x168] sm:$0xff]
      %v458 = vld [vmem:[#allocation9 + $0x170] sm:$0xff]
      %v459 = vld [vmem:[#allocation9 + $0x178] sm:$0xff]
      %v460 = vld [vmem:[#allocation9 + $0x180] sm:$0xff]
      %v461 = vld [vmem:[#allocation9 + $0x188] sm:$0xff]
      %v462 = vld [vmem:[#allocation9 + $0x190] sm:$0xff]
      %v463 = vld [vmem:[#allocation9 + $0x198] sm:$0xff]
      %v464 = vld [vmem:[#allocation9 + $0x1a0] sm:$0xff]
      %v465 = vld [vmem:[#allocation9 + $0x1a8] sm:$0xff]
      %v466 = vld [vmem:[#allocation9 + $0x1b0] sm:$0xff]
      %v467 = vld [vmem:[#allocation9 + $0x1b8] sm:$0xff]
      %v468 = vld [vmem:[#allocation9 + $0x1c0] sm:$0xff]
      %v469 = vld [vmem:[#allocation9 + $0x1c8] sm:$0xff]
      %v470 = vld [vmem:[#allocation9 + $0x1d0] sm:$0xff]
      %v471 = vld [vmem:[#allocation9 + $0x1d8] sm:$0xff]
      %v472 = vld [vmem:[#allocation9 + $0x1e0] sm:$0xff]
      %v473 = vld [vmem:[#allocation9 + $0x1e8] sm:$0xff]
      %v474 = vld [vmem:[#allocation9 + $0x1f0] sm:$0xff]
      %v475 = vld [vmem:[#allocation9 + $0x1f8] sm:$0xff]
      %v476 = vld [vmem:[#allocation2] sm:$0xff]
      %v477 = vld [vmem:[#allocation2 + $0x8] sm:$0xff]
      %v478 = vld [vmem:[#allocation2 + $0x10] sm:$0xff]
      %v479 = vld [vmem:[#allocation2 + $0x18] sm:$0xff]
      %480 = vmatprep.subr.mxu0 %v413
      %481 = vmatpush1.msra.mxu0 %v412
      %482 = vmatprep.subr.mxu0 %v417
      %483 = vmatpush1.msra.mxu0 %v416
      %484 = vmatprep.subr.mxu0 %v421
      %485 = vmatpush1.msra.mxu0 %v420
      %486 = vmatprep.subr.mxu0 %v425
      %487 = vmatpush1.msra.mxu0 %v424
      %488 = vmatprep.subr.mxu0 %v429
      %489 = vmatpush1.msra.mxu0 %v428
      %490 = vmatprep.subr.mxu0 %v433
      %491 = vmatpush1.msra.mxu0 %v432
      %492 = vmatprep.subr.mxu0 %v437
      %493 = vmatpush1.msra.mxu0 %v436
      %494 = vmatprep.subr.mxu0 %v441
      %495 = vmatpush1.msra.mxu0 %v440
      %496 = vmatprep.subr.mxu0 %v445
      %497 = vmatpush1.msra.mxu0 %v444
      %498 = vmatprep.subr.mxu0 %v449
      %499 = vmatpush1.msra.mxu0 %v448
      %500 = vmatprep.subr.mxu0 %v453
      %501 = vmatpush1.msra.mxu0 %v452
      %502 = vmatprep.subr.mxu0 %v457
      %503 = vmatpush1.msra.mxu0 %v456
      %504 = vmatprep.subr.mxu0 %v461
      %505 = vmatpush1.msra.mxu0 %v460
      %506 = vmatprep.subr.mxu0 %v465
      %507 = vmatpush1.msra.mxu0 %v464
      %508 = vmatprep.subr.mxu0 %v469
      %509 = vmatpush1.msra.mxu0 %v468
      %510 = vmatprep.subr.mxu0 %v473
      %511 = vmatpush1.msra.mxu0 %v472
      %512 = vmatprep.subr.mxu0 0.0
      %513 = vmatpush1.msra.mxu0 0.0
      %514 = vmatprep.subr.mxu0 0.0
      %515 = vmatpush1.msra.mxu0 0.0
      %516 = vmatprep.subr.mxu0 0.0
      %517 = vmatpush1.msra.mxu0 0.0
      %518 = vmatprep.subr.mxu0 0.0
      %519 = vmatpush1.msra.mxu0 0.0
      %520 = vmatprep.subr.mxu0 0.0
      %521 = vmatpush1.msra.mxu0 0.0
      %522 = vmatprep.subr.mxu0 0.0
      %523 = vmatpush1.msra.mxu0 0.0
      %524 = vmatprep.subr.mxu0 0.0
      %525 = vmatpush1.msra.mxu0 0.0
      %526 = vmatprep.subr.mxu0 0.0
      %527 = vmatpush1.msra.mxu0 0.0
      %528 = vmatprep.subr.mxu0 0.0
      %529 = vmatpush1.msra.mxu0 0.0
      %530 = vmatprep.subr.mxu0 0.0
      %531 = vmatpush1.msra.mxu0 0.0
      %532 = vmatprep.subr.mxu0 0.0
      %533 = vmatpush1.msra.mxu0 0.0
      %534 = vmatprep.subr.mxu0 0.0
      %535 = vmatpush1.msra.mxu0 0.0
      %536 = vmatprep.subr.mxu0 0.0
      %537 = vmatpush1.msra.mxu0 0.0
      %538 = vmatprep.subr.mxu0 0.0
      %539 = vmatpush1.msra.mxu0 0.0
      %540 = vmatprep.subr.mxu0 0.0
      %541 = vmatpush1.msra.mxu0 0.0
      %542 = vmatprep.subr.mxu0 0.0
      %543 = vmatpush1.msra.mxu0 0.0
      %544 = vmatprep.mubr.f32.mxu0 0.0
      %545 = vmatmul.mubr.f32.gmra.mrb[0].mxu0 0.0
      %v546 = vpop.f32.mrb[0].mxu0
      %v547 = vadd.f32 0.0, %v546
      %v548 = vpop.f32.mrb[0].mxu0
      %v549 = vadd.f32 0.0, %v548
      %550 = vdwg.mxu0
      %551 = vmatprep.subr.mxu0 %v415
      %552 = vmatpush1.msra.mxu0 %v414
      %553 = vmatprep.subr.mxu0 %v419
      %554 = vmatpush1.msra.mxu0 %v418
      %555 = vmatprep.subr.mxu0 %v423
      %556 = vmatpush1.msra.mxu0 %v422
      %557 = vmatprep.subr.mxu0 %v427
      %558 = vmatpush1.msra.mxu0 %v426
      %559 = vmatprep.subr.mxu0 %v431
      %560 = vmatpush1.msra.mxu0 %v430
      %561 = vmatprep.subr.mxu0 %v435
      %562 = vmatpush1.msra.mxu0 %v434
      %563 = vmatprep.subr.mxu0 %v439
      %564 = vmatpush1.msra.mxu0 %v438
      %565 = vmatprep.subr.mxu0 %v443
      %566 = vmatpush1.msra.mxu0 %v442
      %567 = vmatprep.subr.mxu0 %v447
      %568 = vmatpush1.msra.mxu0 %v446
      %569 = vmatprep.subr.mxu0 %v451
      %570 = vmatpush1.msra.mxu0 %v450
      %571 = vmatprep.subr.mxu0 %v455
      %572 = vmatpush1.msra.mxu0 %v454
      %573 = vmatprep.subr.mxu0 %v459
      %574 = vmatpush1.msra.mxu0 %v458
      %575 = vmatprep.subr.mxu0 %v463
      %576 = vmatpush1.msra.mxu0 %v462
      %577 = vmatprep.subr.mxu0 %v467
      %578 = vmatpush1.msra.mxu0 %v466
      %579 = vmatprep.subr.mxu0 %v471
      %580 = vmatpush1.msra.mxu0 %v470
      %581 = vmatprep.subr.mxu0 %v475
      %582 = vmatpush1.msra.mxu0 %v474
      %583 = vmatprep.subr.mxu0 0.0
      %584 = vmatpush1.msra.mxu0 0.0
      %585 = vmatprep.subr.mxu0 0.0
      %586 = vmatpush1.msra.mxu0 0.0
      %587 = vmatprep.subr.mxu0 0.0
      %588 = vmatpush1.msra.mxu0 0.0
      %589 = vmatprep.subr.mxu0 0.0
      %590 = vmatpush1.msra.mxu0 0.0
      %591 = vmatprep.subr.mxu0 0.0
      %592 = vmatpush1.msra.mxu0 0.0
      %593 = vmatprep.subr.mxu0 0.0
      %594 = vmatpush1.msra.mxu0 0.0
      %595 = vmatprep.subr.mxu0 0.0
      %596 = vmatpush1.msra.mxu0 0.0
      %597 = vmatprep.subr.mxu0 0.0
      %598 = vmatpush1.msra.mxu0 0.0
      %599 = vmatprep.subr.mxu0 0.0
      %600 = vmatpush1.msra.mxu0 0.0
      %601 = vmatprep.subr.mxu0 0.0
      %602 = vmatpush1.msra.mxu0 0.0
      %603 = vmatprep.subr.mxu0 0.0
      %604 = vmatpush1.msra.mxu0 0.0
      %605 = vmatprep.subr.mxu0 0.0
      %606 = vmatpush1.msra.mxu0 0.0
      %607 = vmatprep.subr.mxu0 0.0
      %608 = vmatpush1.msra.mxu0 0.0
      %609 = vmatprep.subr.mxu0 0.0
      %610 = vmatpush1.msra.mxu0 0.0
      %611 = vmatprep.subr.mxu0 0.0
      %612 = vmatpush1.msra.mxu0 0.0
      %613 = vmatprep.subr.mxu0 0.0
      %614 = vmatpush1.msra.mxu0 0.0
      %615 = vmatprep.mubr.f32.mxu0 0.0
      %616 = vmatmul.mubr.f32.gmra.mrb[0].mxu0 0.0
      %v617 = vpop.f32.mrb[0].mxu0
      %v618 = vadd.f32 0.0, %v617
      %v619 = vpop.f32.mrb[0].mxu0
      %v620 = vadd.f32 0.0, %v619
      %621 = vdwg.mxu0
      %v622 = vadd.f32 %v476, %v547
      %v623 = vadd.f32 %v477, %v549
      %v624 = vadd.f32 %v478, %v618
      %v625 = vadd.f32 %v479, %v620
      %v626 = vxor.u32 %v622, 2147483648
      %v627 = vxor.u32 %v623, 2147483648
      %v628 = vxor.u32 %v624, 2147483648
      %v629 = vmul.f32 %v626, 1.442695
      %v630 = vpow.pop %v629
      %v631 = vmul.f32 %v627, 1.442695
      %v632 = vpow.pop %v631
      %v633 = vmul.f32 %v628, 1.442695
      %v634 = vpow.pop %v633
      %v635 = vadd.f32 %v630, 1.0
      %v636 = vadd.f32 %v632, 1.0
      %v637 = vadd.f32 %v634, 1.0
      %v638 = vrcp.pop %v635
      %v639 = vmul.f32 1.0, %v638
      %v640 = vrcp.pop %v636
      %v641 = vmul.f32 1.0, %v640
      %v642 = vrcp.pop %v637
      %v643 = vmul.f32 1.0, %v642
      %v644 = vtanh.pop %v625
      %v645 = vmul.f32 %v641, 0.0
      %v646 = vmul.f32 %v639, %v644
      %v647 = vadd.f32 %v645, %v646
      %v648 = vtanh.pop %v647
      %v649 = vmul.f32 %v643, %v648
      %650 = vst [vmem:[#allocation3] sm:$0xff] %v649
      %s651 = scalar_lea.vmem [#allocation2], 32
      %v652 = vld [vmem:[%s651] sm:$0xff]
      %v653 = vld [vmem:[%s651 + $0x8] sm:$0xff]
      %v654 = vld [vmem:[%s651 + $0x10] sm:$0xff]
      %v655 = vld [vmem:[%s651 + $0x18] sm:$0xff]
      %656 = vmatprep.subr.mxu0 %v413
      %657 = vmatpush1.msra.mxu0 %v412
      %658 = vmatprep.subr.mxu0 %v417
      %659 = vmatpush1.msra.mxu0 %v416
      %660 = vmatprep.subr.mxu0 %v421
      %661 = vmatpush1.msra.mxu0 %v420
      %662 = vmatprep.subr.mxu0 %v425
      %663 = vmatpush1.msra.mxu0 %v424
      %664 = vmatprep.subr.mxu0 %v429
      %665 = vmatpush1.msra.mxu0 %v428
      %666 = vmatprep.subr.mxu0 %v433
      %667 = vmatpush1.msra.mxu0 %v432
      %668 = vmatprep.subr.mxu0 %v437
      %669 = vmatpush1.msra.mxu0 %v436
      %670 = vmatprep.subr.mxu0 %v441
      %671 = vmatpush1.msra.mxu0 %v440
      %672 = vmatprep.subr.mxu0 %v445
      %673 = vmatpush1.msra.mxu0 %v444
      %674 = vmatprep.subr.mxu0 %v449
      %675 = vmatpush1.msra.mxu0 %v448
      %676 = vmatprep.subr.mxu0 %v453
      %677 = vmatpush1.msra.mxu0 %v452
      %678 = vmatprep.subr.mxu0 %v457
      %679 = vmatpush1.msra.mxu0 %v456
      %680 = vmatprep.subr.mxu0 %v461
      %681 = vmatpush1.msra.mxu0 %v460
      %682 = vmatprep.subr.mxu0 %v465
      %683 = vmatpush1.msra.mxu0 %v464
      %684 = vmatprep.subr.mxu0 %v469
      %685 = vmatpush1.msra.mxu0 %v468
      %686 = vmatprep.subr.mxu0 %v473
      %687 = vmatpush1.msra.mxu0 %v472
      %688 = vmatprep.subr.mxu0 0.0
      %689 = vmatpush1.msra.mxu0 0.0
      %690 = vmatprep.subr.mxu0 0.0
      %691 = vmatpush1.msra.mxu0 0.0
      %692 = vmatprep.subr.mxu0 0.0
      %693 = vmatpush1.msra.mxu0 0.0
      %694 = vmatprep.subr.mxu0 0.0
      %695 = vmatpush1.msra.mxu0 0.0
      %696 = vmatprep.subr.mxu0 0.0
      %697 = vmatpush1.msra.mxu0 0.0
      %698 = vmatprep.subr.mxu0 0.0
      %699 = vmatpush1.msra.mxu0 0.0
      %700 = vmatprep.subr.mxu0 0.0
      %701 = vmatpush1.msra.mxu0 0.0
      %702 = vmatprep.subr.mxu0 0.0
      %703 = vmatpush1.msra.mxu0 0.0
      %704 = vmatprep.subr.mxu0 0.0
      %705 = vmatpush1.msra.mxu0 0.0
      %706 = vmatprep.subr.mxu0 0.0
      %707 = vmatpush1.msra.mxu0 0.0
      %708 = vmatprep.subr.mxu0 0.0
      %709 = vmatpush1.msra.mxu0 0.0
      %710 = vmatprep.subr.mxu0 0.0
      %711 = vmatpush1.msra.mxu0 0.0
      %712 = vmatprep.subr.mxu0 0.0
      %713 = vmatpush1.msra.mxu0 0.0
      %714 = vmatprep.subr.mxu0 0.0
      %715 = vmatpush1.msra.mxu0 0.0
      %716 = vmatprep.subr.mxu0 0.0
      %717 = vmatpush1.msra.mxu0 0.0
      %718 = vmatprep.subr.mxu0 0.0
      %719 = vmatpush1.msra.mxu0 0.0
      %720 = vmatprep.mubr.f32.mxu0 0.0
      %721 = vmatmul.mubr.f32.gmra.mrb[0].mxu0 %v649
      %v722 = vpop.f32.mrb[0].mxu0
      %v723 = vadd.f32 0.0, %v722
      %v724 = vpop.f32.mrb[0].mxu0
      %v725 = vadd.f32 0.0, %v724
      %726 = vdwg.mxu0
      %727 = vmatprep.subr.mxu0 %v415
      %728 = vmatpush1.msra.mxu0 %v414
      %729 = vmatprep.subr.mxu0 %v419
      %730 = vmatpush1.msra.mxu0 %v418
      %731 = vmatprep.subr.mxu0 %v423
      %732 = vmatpush1.msra.mxu0 %v422
      %733 = vmatprep.subr.mxu0 %v427
      %734 = vmatpush1.msra.mxu0 %v426
      %735 = vmatprep.subr.mxu0 %v431
      %736 = vmatpush1.msra.mxu0 %v430
      %737 = vmatprep.subr.mxu0 %v435
      %738 = vmatpush1.msra.mxu0 %v434
      %739 = vmatprep.subr.mxu0 %v439
      %740 = vmatpush1.msra.mxu0 %v438
      %741 = vmatprep.subr.mxu0 %v443
      %742 = vmatpush1.msra.mxu0 %v442
      %743 = vmatprep.subr.mxu0 %v447
      %744 = vmatpush1.msra.mxu0 %v446
      %745 = vmatprep.subr.mxu0 %v451
      %746 = vmatpush1.msra.mxu0 %v450
      %747 = vmatprep.subr.mxu0 %v455
      %748 = vmatpush1.msra.mxu0 %v454
      %749 = vmatprep.subr.mxu0 %v459
      %750 = vmatpush1.msra.mxu0 %v458
      %751 = vmatprep.subr.mxu0 %v463
      %752 = vmatpush1.msra.mxu0 %v462
      %753 = vmatprep.subr.mxu0 %v467
      %754 = vmatpush1.msra.mxu0 %v466
      %755 = vmatprep.subr.mxu0 %v471
      %756 = vmatpush1.msra.mxu0 %v470
      %757 = vmatprep.subr.mxu0 %v475
      %758 = vmatpush1.msra.mxu0 %v474
      %759 = vmatprep.subr.mxu0 0.0
      %760 = vmatpush1.msra.mxu0 0.0
      %761 = vmatprep.subr.mxu0 0.0
      %762 = vmatpush1.msra.mxu0 0.0
      %763 = vmatprep.subr.mxu0 0.0
      %764 = vmatpush1.msra.mxu0 0.0
      %765 = vmatprep.subr.mxu0 0.0
      %766 = vmatpush1.msra.mxu0 0.0
      %767 = vmatprep.subr.mxu0 0.0
      %768 = vmatpush1.msra.mxu0 0.0
      %769 = vmatprep.subr.mxu0 0.0
      %770 = vmatpush1.msra.mxu0 0.0
      %771 = vmatprep.subr.mxu0 0.0
      %772 = vmatpush1.msra.mxu0 0.0
      %773 = vmatprep.subr.mxu0 0.0
      %774 = vmatpush1.msra.mxu0 0.0
      %775 = vmatprep.subr.mxu0 0.0
      %776 = vmatpush1.msra.mxu0 0.0
      %777 = vmatprep.subr.mxu0 0.0
      %778 = vmatpush1.msra.mxu0 0.0
      %779 = vmatprep.subr.mxu0 0.0
      %780 = vmatpush1.msra.mxu0 0.0
      %781 = vmatprep.subr.mxu0 0.0
      %782 = vmatpush1.msra.mxu0 0.0
      %783 = vmatprep.subr.mxu0 0.0
      %784 = vmatpush1.msra.mxu0 0.0
      %785 = vmatprep.subr.mxu0 0.0
      %786 = vmatpush1.msra.mxu0 0.0
      %787 = vmatprep.subr.mxu0 0.0
      %788 = vmatpush1.msra.mxu0 0.0
      %789 = vmatprep.subr.mxu0 0.0
      %790 = vmatpush1.msra.mxu0 0.0
      %791 = vmatprep.mubr.f32.mxu0 0.0
      %792 = vmatmul.mubr.f32.gmra.mrb[0].mxu0 %v649
      %v793 = vpop.f32.mrb[0].mxu0
      %v794 = vadd.f32 0.0, %v793
      %v795 = vpop.f32.mrb[0].mxu0
      %v796 = vadd.f32 0.0, %v795
      %797 = vdwg.mxu0
      %v798 = vadd.f32 %v652, %v723
      %v799 = vadd.f32 %v653, %v725
      %v800 = vadd.f32 %v654, %v794
      %v801 = vadd.f32 %v655, %v796
      %v802 = vxor.u32 %v798, 2147483648
      %v803 = vxor.u32 %v799, 2147483648
      %v804 = vxor.u32 %v800, 2147483648
      %v805 = vmul.f32 %v802, 1.442695
      %v806 = vpow.pop %v805
      %v807 = vmul.f32 %v803, 1.442695
      %v808 = vpow.pop %v807
      %v809 = vmul.f32 %v804, 1.442695
      %v810 = vpow.pop %v809
      %v811 = vadd.f32 %v806, 1.0
      %v812 = vadd.f32 %v808, 1.0
      %v813 = vadd.f32 %v810, 1.0
      %v814 = vrcp.pop %v811
      %v815 = vmul.f32 1.0, %v814
      %v816 = vrcp.pop %v812
      %v817 = vmul.f32 1.0, %v816
      %v818 = vrcp.pop %v813
      %v819 = vmul.f32 1.0, %v818
      %v820 = vtanh.pop %v801
      %v821 = vmul.f32 %v817, %v647
      %v822 = vmul.f32 %v815, %v820
      %v823 = vadd.f32 %v821, %v822
      %v824 = vtanh.pop %v823
      %v825 = vmul.f32 %v819, %v824
      %s826 = scalar_lea.vmem [#allocation3], 8
      %827 = vst [vmem:[%s826] sm:$0xff] %v825
      %s828 = scalar_lea.vmem [#allocation2], 64
      %v829 = vld [vmem:[%s828] sm:$0xff]
      %v830 = vld [vmem:[%s828 + $0x8] sm:$0xff]
      %v831 = vld [vmem:[%s828 + $0x10] sm:$0xff]
      %v832 = vld [vmem:[%s828 + $0x18] sm:$0xff]
      %833 = vmatprep.subr.mxu0 %v413
      %834 = vmatpush1.msra.mxu0 %v412
      %835 = vmatprep.subr.mxu0 %v417
      %836 = vmatpush1.msra.mxu0 %v416
      %837 = vmatprep.subr.mxu0 %v421
      %838 = vmatpush1.msra.mxu0 %v420
      %839 = vmatprep.subr.mxu0 %v425
      %840 = vmatpush1.msra.mxu0 %v424
      %841 = vmatprep.subr.mxu0 %v429
      %842 = vmatpush1.msra.mxu0 %v428
      %843 = vmatprep.subr.mxu0 %v433
      %844 = vmatpush1.msra.mxu0 %v432
      %845 = vmatprep.subr.mxu0 %v437
      %846 = vmatpush1.msra.mxu0 %v436
      %847 = vmatprep.subr.mxu0 %v441
      %848 = vmatpush1.msra.mxu0 %v440
      %849 = vmatprep.subr.mxu0 %v445
      %850 = vmatpush1.msra.mxu0 %v444
      %851 = vmatprep.subr.mxu0 %v449
      %852 = vmatpush1.msra.mxu0 %v448
      %853 = vmatprep.subr.mxu0 %v453
      %854 = vmatpush1.msra.mxu0 %v452
      %855 = vmatprep.subr.mxu0 %v457
      %856 = vmatpush1.msra.mxu0 %v456
      %857 = vmatprep.subr.mxu0 %v461
      %858 = vmatpush1.msra.mxu0 %v460
      %859 = vmatprep.subr.mxu0 %v465
      %860 = vmatpush1.msra.mxu0 %v464
      %861 = vmatprep.subr.mxu0 %v469
      %862 = vmatpush1.msra.mxu0 %v468
      %863 = vmatprep.subr.mxu0 %v473
      %864 = vmatpush1.msra.mxu0 %v472
      %865 = vmatprep.subr.mxu0 0.0
      %866 = vmatpush1.msra.mxu0 0.0
      %867 = vmatprep.subr.mxu0 0.0
      %868 = vmatpush1.msra.mxu0 0.0
      %869 = vmatprep.subr.mxu0 0.0
      %870 = vmatpush1.msra.mxu0 0.0
      %871 = vmatprep.subr.mxu0 0.0
      %872 = vmatpush1.msra.mxu0 0.0
      %873 = vmatprep.subr.mxu0 0.0
      %874 = vmatpush1.msra.mxu0 0.0
      %875 = vmatprep.subr.mxu0 0.0
      %876 = vmatpush1.msra.mxu0 0.0
      %877 = vmatprep.subr.mxu0 0.0
      %878 = vmatpush1.msra.mxu0 0.0
      %879 = vmatprep.subr.mxu0 0.0
      %880 = vmatpush1.msra.mxu0 0.0
      %881 = vmatprep.subr.mxu0 0.0
      %882 = vmatpush1.msra.mxu0 0.0
      %883 = vmatprep.subr.mxu0 0.0
      %884 = vmatpush1.msra.mxu0 0.0
      %885 = vmatprep.subr.mxu0 0.0
      %886 = vmatpush1.msra.mxu0 0.0
      %887 = vmatprep.subr.mxu0 0.0
      %888 = vmatpush1.msra.mxu0 0.0
      %889 = vmatprep.subr.mxu0 0.0
      %890 = vmatpush1.msra.mxu0 0.0
      %891 = vmatprep.subr.mxu0 0.0
      %892 = vmatpush1.msra.mxu0 0.0
      %893 = vmatprep.subr.mxu0 0.0
      %894 = vmatpush1.msra.mxu0 0.0
      %895 = vmatprep.subr.mxu0 0.0
      %896 = vmatpush1.msra.mxu0 0.0
      %897 = vmatprep.mubr.f32.mxu0 0.0
      %898 = vmatmul.mubr.f32.gmra.mrb[0].mxu0 %v825
      %v899 = vpop.f32.mrb[0].mxu0
      %v900 = vadd.f32 0.0, %v899
      %v901 = vpop.f32.mrb[0].mxu0
      %v902 = vadd.f32 0.0, %v901
      %903 = vdwg.mxu0
      %904 = vmatprep.subr.mxu0 %v415
      %905 = vmatpush1.msra.mxu0 %v414
      %906 = vmatprep.subr.mxu0 %v419
      %907 = vmatpush1.msra.mxu0 %v418
      %908 = vmatprep.subr.mxu0 %v423
      %909 = vmatpush1.msra.mxu0 %v422
      %910 = vmatprep.subr.mxu0 %v427
      %911 = vmatpush1.msra.mxu0 %v426
      %912 = vmatprep.subr.mxu0 %v431
      %913 = vmatpush1.msra.mxu0 %v430
      %914 = vmatprep.subr.mxu0 %v435
      %915 = vmatpush1.msra.mxu0 %v434
      %916 = vmatprep.subr.mxu0 %v439
      %917 = vmatpush1.msra.mxu0 %v438
      %918 = vmatprep.subr.mxu0 %v443
      %919 = vmatpush1.msra.mxu0 %v442
      %920 = vmatprep.subr.mxu0 %v447
      %921 = vmatpush1.msra.mxu0 %v446
      %922 = vmatprep.subr.mxu0 %v451
      %923 = vmatpush1.msra.mxu0 %v450
      %924 = vmatprep.subr.mxu0 %v455
      %925 = vmatpush1.msra.mxu0 %v454
      %926 = vmatprep.subr.mxu0 %v459
      %927 = vmatpush1.msra.mxu0 %v458
      %928 = vmatprep.subr.mxu0 %v463
      %929 = vmatpush1.msra.mxu0 %v462
      %930 = vmatprep.subr.mxu0 %v467
      %931 = vmatpush1.msra.mxu0 %v466
      %932 = vmatprep.subr.mxu0 %v471
      %933 = vmatpush1.msra.mxu0 %v470
      %934 = vmatprep.subr.mxu0 %v475
      %935 = vmatpush1.msra.mxu0 %v474
      %936 = vmatprep.subr.mxu0 0.0
      %937 = vmatpush1.msra.mxu0 0.0
      %938 = vmatprep.subr.mxu0 0.0
      %939 = vmatpush1.msra.mxu0 0.0
      %940 = vmatprep.subr.mxu0 0.0
      %941 = vmatpush1.msra.mxu0 0.0
      %942 = vmatprep.subr.mxu0 0.0
      %943 = vmatpush1.msra.mxu0 0.0
      %944 = vmatprep.subr.mxu0 0.0
      %945 = vmatpush1.msra.mxu0 0.0
      %946 = vmatprep.subr.mxu0 0.0
      %947 = vmatpush1.msra.mxu0 0.0
      %948 = vmatprep.subr.mxu0 0.0
      %949 = vmatpush1.msra.mxu0 0.0
      %950 = vmatprep.subr.mxu0 0.0
      %951 = vmatpush1.msra.mxu0 0.0
      %952 = vmatprep.subr.mxu0 0.0
      %953 = vmatpush1.msra.mxu0 0.0
      %954 = vmatprep.subr.mxu0 0.0
      %955 = vmatpush1.msra.mxu0 0.0
      %956 = vmatprep.subr.mxu0 0.0
      %957 = vmatpush1.msra.mxu0 0.0
      %958 = vmatprep.subr.mxu0 0.0
      %959 = vmatpush1.msra.mxu0 0.0
      %960 = vmatprep.subr.mxu0 0.0
      %961 = vmatpush1.msra.mxu0 0.0
      %962 = vmatprep.subr.mxu0 0.0
      %963 = vmatpush1.msra.mxu0 0.0
      %964 = vmatprep.subr.mxu0 0.0
      %965 = vmatpush1.msra.mxu0 0.0
      %966 = vmatprep.subr.mxu0 0.0
      %967 = vmatpush1.msra.mxu0 0.0
      %968 = vmatprep.mubr.f32.mxu0 0.0
      %969 = vmatmul.mubr.f32.gmra.mrb[0].mxu0 %v825
      %v970 = vpop.f32.mrb[0].mxu0
      %v971 = vadd.f32 0.0, %v970
      %v972 = vpop.f32.mrb[0].mxu0
      %v973 = vadd.f32 0.0, %v972
      %974 = vdwg.mxu0
      %v975 = vadd.f32 %v829, %v900
      %v976 = vadd.f32 %v830, %v902
      %v977 = vadd.f32 %v831, %v971
      %v978 = vadd.f32 %v832, %v973
      %v979 = vxor.u32 %v975, 2147483648
      %v980 = vxor.u32 %v976, 2147483648
      %v981 = vxor.u32 %v977, 2147483648
      %v982 = vmul.f32 %v979, 1.442695
      %v983 = vpow.pop %v982
      %v984 = vmul.f32 %v980, 1.442695
      %v985 = vpow.pop %v984
      %v986 = vmul.f32 %v981, 1.442695
      %v987 = vpow.pop %v986
      %v988 = vadd.f32 %v983, 1.0
      %v989 = vadd.f32 %v985, 1.0
      %v990 = vadd.f32 %v987, 1.0
      %v991 = vrcp.pop %v988
      %v992 = vmul.f32 1.0, %v991
      %v993 = vrcp.pop %v989
      %v994 = vmul.f32 1.0, %v993
      %v995 = vrcp.pop %v990
      %v996 = vmul.f32 1.0, %v995
      %v997 = vtanh.pop %v978
      %v998 = vmul.f32 %v994, %v823
      %v999 = vmul.f32 %v992, %v997
      %v1000 = vadd.f32 %v998, %v999
      %v1001 = vtanh.pop %v1000
      %v1002 = vmul.f32 %v996, %v1001
      %s1003 = scalar_lea.vmem [#allocation3], 16
      %1004 = vst [vmem:[%s1003] sm:$0xff] %v1002
      %s1005 = scalar_lea.vmem [#allocation2], 96
      %v1006 = vld [vmem:[%s1005] sm:$0xff]
      %v1007 = vld [vmem:[%s1005 + $0x8] sm:$0xff]
      %v1008 = vld [vmem:[%s1005 + $0x10] sm:$0xff]
      %v1009 = vld [vmem:[%s1005 + $0x18] sm:$0xff]
      %1010 = vmatprep.subr.mxu0 %v413
      %1011 = vmatpush1.msra.mxu0 %v412
      %1012 = vmatprep.subr.mxu0 %v417
      %1013 = vmatpush1.msra.mxu0 %v416
      %1014 = vmatprep.subr.mxu0 %v421
      %1015 = vmatpush1.msra.mxu0 %v420
      %1016 = vmatprep.subr.mxu0 %v425
      %1017 = vmatpush1.msra.mxu0 %v424
      %1018 = vmatprep.subr.mxu0 %v429
      %1019 = vmatpush1.msra.mxu0 %v428
      %1020 = vmatprep.subr.mxu0 %v433
      %1021 = vmatpush1.msra.mxu0 %v432
      %1022 = vmatprep.subr.mxu0 %v437
      %1023 = vmatpush1.msra.mxu0 %v436
      %1024 = vmatprep.subr.mxu0 %v441
      %1025 = vmatpush1.msra.mxu0 %v440
      %1026 = vmatprep.subr.mxu0 %v445
      %1027 = vmatpush1.msra.mxu0 %v444
      %1028 = vmatprep.subr.mxu0 %v449
      %1029 = vmatpush1.msra.mxu0 %v448
      %1030 = vmatprep.subr.mxu0 %v453
      %1031 = vmatpush1.msra.mxu0 %v452
      %1032 = vmatprep.subr.mxu0 %v457
      %1033 = vmatpush1.msra.mxu0 %v456
      %1034 = vmatprep.subr.mxu0 %v461
      %1035 = vmatpush1.msra.mxu0 %v460
      %1036 = vmatprep.subr.mxu0 %v465
      %1037 = vmatpush1.msra.mxu0 %v464
      %1038 = vmatprep.subr.mxu0 %v469
      %1039 = vmatpush1.msra.mxu0 %v468
      %1040 = vmatprep.subr.mxu0 %v473
      %1041 = vmatpush1.msra.mxu0 %v472
      %1042 = vmatprep.subr.mxu0 0.0
      %1043 = vmatpush1.msra.mxu0 0.0
      %1044 = vmatprep.subr.mxu0 0.0
      %1045 = vmatpush1.msra.mxu0 0.0
      %1046 = vmatprep.subr.mxu0 0.0
      %1047 = vmatpush1.msra.mxu0 0.0
      %1048 = vmatprep.subr.mxu0 0.0
      %1049 = vmatpush1.msra.mxu0 0.0
      %1050 = vmatprep.subr.mxu0 0.0
      %1051 = vmatpush1.msra.mxu0 0.0
      %1052 = vmatprep.subr.mxu0 0.0
      %1053 = vmatpush1.msra.mxu0 0.0
      %1054 = vmatprep.subr.mxu0 0.0
      %1055 = vmatpush1.msra.mxu0 0.0
      %1056 = vmatprep.subr.mxu0 0.0
      %1057 = vmatpush1.msra.mxu0 0.0
      %1058 = vmatprep.subr.mxu0 0.0
      %1059 = vmatpush1.msra.mxu0 0.0
      %1060 = vmatprep.subr.mxu0 0.0
      %1061 = vmatpush1.msra.mxu0 0.0
      %1062 = vmatprep.subr.mxu0 0.0
      %1063 = vmatpush1.msra.mxu0 0.0
      %1064 = vmatprep.subr.mxu0 0.0
      %1065 = vmatpush1.msra.mxu0 0.0
      %1066 = vmatprep.subr.mxu0 0.0
      %1067 = vmatpush1.msra.mxu0 0.0
      %1068 = vmatprep.subr.mxu0 0.0
      %1069 = vmatpush1.msra.mxu0 0.0
      %1070 = vmatprep.subr.mxu0 0.0
      %1071 = vmatpush1.msra.mxu0 0.0
      %1072 = vmatprep.subr.mxu0 0.0
      %1073 = vmatpush1.msra.mxu0 0.0
      %1074 = vmatprep.mubr.f32.mxu0 0.0
      %1075 = vmatmul.mubr.f32.gmra.mrb[0].mxu0 %v1002
      %v1076 = vpop.f32.mrb[0].mxu0
      %v1077 = vadd.f32 0.0, %v1076
      %v1078 = vpop.f32.mrb[0].mxu0
      %v1079 = vadd.f32 0.0, %v1078
      %1080 = vdwg.mxu0
      %1081 = vmatprep.subr.mxu0 %v415
      %1082 = vmatpush1.msra.mxu0 %v414
      %1083 = vmatprep.subr.mxu0 %v419
      %1084 = vmatpush1.msra.mxu0 %v418
      %1085 = vmatprep.subr.mxu0 %v423
      %1086 = vmatpush1.msra.mxu0 %v422
      %1087 = vmatprep.subr.mxu0 %v427
      %1088 = vmatpush1.msra.mxu0 %v426
      %1089 = vmatprep.subr.mxu0 %v431
      %1090 = vmatpush1.msra.mxu0 %v430
      %1091 = vmatprep.subr.mxu0 %v435
      %1092 = vmatpush1.msra.mxu0 %v434
      %1093 = vmatprep.subr.mxu0 %v439
      %1094 = vmatpush1.msra.mxu0 %v438
      %1095 = vmatprep.subr.mxu0 %v443
      %1096 = vmatpush1.msra.mxu0 %v442
      %1097 = vmatprep.subr.mxu0 %v447
      %1098 = vmatpush1.msra.mxu0 %v446
      %1099 = vmatprep.subr.mxu0 %v451
      %1100 = vmatpush1.msra.mxu0 %v450
      %1101 = vmatprep.subr.mxu0 %v455
      %1102 = vmatpush1.msra.mxu0 %v454
      %1103 = vmatprep.subr.mxu0 %v459
      %1104 = vmatpush1.msra.mxu0 %v458
      %1105 = vmatprep.subr.mxu0 %v463
      %1106 = vmatpush1.msra.mxu0 %v462
      %1107 = vmatprep.subr.mxu0 %v467
      %1108 = vmatpush1.msra.mxu0 %v466
      %1109 = vmatprep.subr.mxu0 %v471
      %1110 = vmatpush1.msra.mxu0 %v470
      %1111 = vmatprep.subr.mxu0 %v475
      %1112 = vmatpush1.msra.mxu0 %v474
      %1113 = vmatprep.subr.mxu0 0.0
      %1114 = vmatpush1.msra.mxu0 0.0
      %1115 = vmatprep.subr.mxu0 0.0
      %1116 = vmatpush1.msra.mxu0 0.0
      %1117 = vmatprep.subr.mxu0 0.0
      %1118 = vmatpush1.msra.mxu0 0.0
      %1119 = vmatprep.subr.mxu0 0.0
      %1120 = vmatpush1.msra.mxu0 0.0
      %1121 = vmatprep.subr.mxu0 0.0
      %1122 = vmatpush1.msra.mxu0 0.0
      %1123 = vmatprep.subr.mxu0 0.0
      %1124 = vmatpush1.msra.mxu0 0.0
      %1125 = vmatprep.subr.mxu0 0.0
      %1126 = vmatpush1.msra.mxu0 0.0
      %1127 = vmatprep.subr.mxu0 0.0
      %1128 = vmatpush1.msra.mxu0 0.0
      %1129 = vmatprep.subr.mxu0 0.0
      %1130 = vmatpush1.msra.mxu0 0.0
      %1131 = vmatprep.subr.mxu0 0.0
      %1132 = vmatpush1.msra.mxu0 0.0
      %1133 = vmatprep.subr.mxu0 0.0
      %1134 = vmatpush1.msra.mxu0 0.0
      %1135 = vmatprep.subr.mxu0 0.0
      %1136 = vmatpush1.msra.mxu0 0.0
      %1137 = vmatprep.subr.mxu0 0.0
      %1138 = vmatpush1.msra.mxu0 0.0
      %1139 = vmatprep.subr.mxu0 0.0
      %1140 = vmatpush1.msra.mxu0 0.0
      %1141 = vmatprep.subr.mxu0 0.0
      %1142 = vmatpush1.msra.mxu0 0.0
      %1143 = vmatprep.subr.mxu0 0.0
      %1144 = vmatpush1.msra.mxu0 0.0
      %1145 = vmatprep.mubr.f32.mxu0 0.0
      %1146 = vmatmul.mubr.f32.gmra.mrb[0].mxu0 %v1002
      %v1147 = vpop.f32.mrb[0].mxu0
      %v1148 = vadd.f32 0.0, %v1147
      %v1149 = vpop.f32.mrb[0].mxu0
      %v1150 = vadd.f32 0.0, %v1149
      %1151 = vdwg.mxu0
      %v1152 = vadd.f32 %v1006, %v1077
      %v1153 = vadd.f32 %v1007, %v1079
      %v1154 = vadd.f32 %v1008, %v1148
      %v1155 = vadd.f32 %v1009, %v1150
      %v1156 = vxor.u32 %v1152, 2147483648
      %v1157 = vxor.u32 %v1153, 2147483648
      %v1158 = vxor.u32 %v1154, 2147483648
      %v1159 = vmul.f32 %v1156, 1.442695
      %v1160 = vpow.pop %v1159
      %v1161 = vmul.f32 %v1157, 1.442695
      %v1162 = vpow.pop %v1161
      %v1163 = vmul.f32 %v1158, 1.442695
      %v1164 = vpow.pop %v1163
      %v1165 = vadd.f32 %v1160, 1.0
      %v1166 = vadd.f32 %v1162, 1.0
      %v1167 = vadd.f32 %v1164, 1.0
      %v1168 = vrcp.pop %v1165
      %v1169 = vmul.f32 1.0, %v1168
      %v1170 = vrcp.pop %v1166
      %v1171 = vmul.f32 1.0, %v1170
      %v1172 = vrcp.pop %v1167
      %v1173 = vmul.f32 1.0, %v1172
      %v1174 = vtanh.pop %v1155
      %v1175 = vmul.f32 %v1171, %v1000
      %v1176 = vmul.f32 %v1169, %v1174
      %v1177 = vadd.f32 %v1175, %v1176
      %v1178 = vtanh.pop %v1177
      %v1179 = vmul.f32 %v1173, %v1178
      %s1180 = scalar_lea.vmem [#allocation3], 24
      %1181 = vst [vmem:[%s1180] sm:$0xff] %v1179
      %s1182 = scalar_lea.vmem [#allocation2], 128
      %v1183 = vld [vmem:[%s1182] sm:$0xff]
      %v1184 = vld [vmem:[%s1182 + $0x8] sm:$0xff]
      %v1185 = vld [vmem:[%s1182 + $0x10] sm:$0xff]
      %v1186 = vld [vmem:[%s1182 + $0x18] sm:$0xff]
      %1187 = vmatprep.subr.mxu0 %v413
      %1188 = vmatpush1.msra.mxu0 %v412
      %1189 = vmatprep.subr.mxu0 %v417
      %1190 = vmatpush1.msra.mxu0 %v416
      %1191 = vmatprep.subr.mxu0 %v421
      %1192 = vmatpush1.msra.mxu0 %v420
      %1193 = vmatprep.subr.mxu0 %v425
      %1194 = vmatpush1.msra.mxu0 %v424
      %1195 = vmatprep.subr.mxu0 %v429
      %1196 = vmatpush1.msra.mxu0 %v428
      %1197 = vmatprep.subr.mxu0 %v433
      %1198 = vmatpush1.msra.mxu0 %v432
      %1199 = vmatprep.subr.mxu0 %v437
      %1200 = vmatpush1.msra.mxu0 %v436
      %1201 = vmatprep.subr.mxu0 %v441
      %1202 = vmatpush1.msra.mxu0 %v440
      %1203 = vmatprep.subr.mxu0 %v445
      %1204 = vmatpush1.msra.mxu0 %v444
      %1205 = vmatprep.subr.mxu0 %v449
      %1206 = vmatpush1.msra.mxu0 %v448
      %1207 = vmatprep.subr.mxu0 %v453
      %1208 = vmatpush1.msra.mxu0 %v452
      %1209 = vmatprep.subr.mxu0 %v457
      %1210 = vmatpush1.msra.mxu0 %v456
      %1211 = vmatprep.subr.mxu0 %v461
      %1212 = vmatpush1.msra.mxu0 %v460
      %1213 = vmatprep.subr.mxu0 %v465
      %1214 = vmatpush1.msra.mxu0 %v464
      %1215 = vmatprep.subr.mxu0 %v469
      %1216 = vmatpush1.msra.mxu0 %v468
      %1217 = vmatprep.subr.mxu0 %v473
      %1218 = vmatpush1.msra.mxu0 %v472
      %1219 = vmatprep.subr.mxu0 0.0
      %1220 = vmatpush1.msra.mxu0 0.0
      %1221 = vmatprep.subr.mxu0 0.0
      %1222 = vmatpush1.msra.mxu0 0.0
      %1223 = vmatprep.subr.mxu0 0.0
      %1224 = vmatpush1.msra.mxu0 0.0
      %1225 = vmatprep.subr.mxu0 0.0
      %1226 = vmatpush1.msra.mxu0 0.0
      %1227 = vmatprep.subr.mxu0 0.0
      %1228 = vmatpush1.msra.mxu0 0.0
      %1229 = vmatprep.subr.mxu0 0.0
      %1230 = vmatpush1.msra.mxu0 0.0
      %1231 = vmatprep.subr.mxu0 0.0
      %1232 = vmatpush1.msra.mxu0 0.0
      %1233 = vmatprep.subr.mxu0 0.0
      %1234 = vmatpush1.msra.mxu0 0.0
      %1235 = vmatprep.subr.mxu0 0.0
      %1236 = vmatpush1.msra.mxu0 0.0
      %1237 = vmatprep.subr.mxu0 0.0
      %1238 = vmatpush1.msra.mxu0 0.0
      %1239 = vmatprep.subr.mxu0 0.0
      %1240 = vmatpush1.msra.mxu0 0.0
      %1241 = vmatprep.subr.mxu0 0.0
      %1242 = vmatpush1.msra.mxu0 0.0
      %1243 = vmatprep.subr.mxu0 0.0
      %1244 = vmatpush1.msra.mxu0 0.0
      %1245 = vmatprep.subr.mxu0 0.0
      %1246 = vmatpush1.msra.mxu0 0.0
      %1247 = vmatprep.subr.mxu0 0.0
      %1248 = vmatpush1.msra.mxu0 0.0
      %1249 = vmatprep.subr.mxu0 0.0
      %1250 = vmatpush1.msra.mxu0 0.0
      %1251 = vmatprep.mubr.f32.mxu0 0.0
      %1252 = vmatmul.mubr.f32.gmra.mrb[0].mxu0 %v1179
      %v1253 = vpop.f32.mrb[0].mxu0
      %v1254 = vadd.f32 0.0, %v1253
      %v1255 = vpop.f32.mrb[0].mxu0
      %v1256 = vadd.f32 0.0, %v1255
      %1257 = vdwg.mxu0
      %1258 = vmatprep.subr.mxu0 %v415
      %1259 = vmatpush1.msra.mxu0 %v414
      %1260 = vmatprep.subr.mxu0 %v419
      %1261 = vmatpush1.msra.mxu0 %v418
      %1262 = vmatprep.subr.mxu0 %v423
      %1263 = vmatpush1.msra.mxu0 %v422
      %1264 = vmatprep.subr.mxu0 %v427
      %1265 = vmatpush1.msra.mxu0 %v426
      %1266 = vmatprep.subr.mxu0 %v431
      %1267 = vmatpush1.msra.mxu0 %v430
      %1268 = vmatprep.subr.mxu0 %v435
      %1269 = vmatpush1.msra.mxu0 %v434
      %1270 = vmatprep.subr.mxu0 %v439
      %1271 = vmatpush1.msra.mxu0 %v438
      %1272 = vmatprep.subr.mxu0 %v443
      %1273 = vmatpush1.msra.mxu0 %v442
      %1274 = vmatprep.subr.mxu0 %v447
      %1275 = vmatpush1.msra.mxu0 %v446
      %1276 = vmatprep.subr.mxu0 %v451
      %1277 = vmatpush1.msra.mxu0 %v450
      %1278 = vmatprep.subr.mxu0 %v455
      %1279 = vmatpush1.msra.mxu0 %v454
      %1280 = vmatprep.subr.mxu0 %v459
      %1281 = vmatpush1.msra.mxu0 %v458
      %1282 = vmatprep.subr.mxu0 %v463
      %1283 = vmatpush1.msra.mxu0 %v462
      %1284 = vmatprep.subr.mxu0 %v467
      %1285 = vmatpush1.msra.mxu0 %v466
      %1286 = vmatprep.subr.mxu0 %v471
      %1287 = vmatpush1.msra.mxu0 %v470
      %1288 = vmatprep.subr.mxu0 %v475
      %1289 = vmatpush1.msra.mxu0 %v474
      %1290 = vmatprep.subr.mxu0 0.0
      %1291 = vmatpush1.msra.mxu0 0.0
      %1292 = vmatprep.subr.mxu0 0.0
      %1293 = vmatpush1.msra.mxu0 0.0
      %1294 = vmatprep.subr.mxu0 0.0
      %1295 = vmatpush1.msra.mxu0 0.0
      %1296 = vmatprep.subr.mxu0 0.0
      %1297 = vmatpush1.msra.mxu0 0.0
      %1298 = vmatprep.subr.mxu0 0.0
      %1299 = vmatpush1.msra.mxu0 0.0
      %1300 = vmatprep.subr.mxu0 0.0
      %1301 = vmatpush1.msra.mxu0 0.0
      %1302 = vmatprep.subr.mxu0 0.0
      %1303 = vmatpush1.msra.mxu0 0.0
      %1304 = vmatprep.subr.mxu0 0.0
      %1305 = vmatpush1.msra.mxu0 0.0
      %1306 = vmatprep.subr.mxu0 0.0
      %1307 = vmatpush1.msra.mxu0 0.0
      %1308 = vmatprep.subr.mxu0 0.0
      %1309 = vmatpush1.msra.mxu0 0.0
      %1310 = vmatprep.subr.mxu0 0.0
      %1311 = vmatpush1.msra.mxu0 0.0
      %1312 = vmatprep.subr.mxu0 0.0
      %1313 = vmatpush1.msra.mxu0 0.0
      %1314 = vmatprep.subr.mxu0 0.0
      %1315 = vmatpush1.msra.mxu0 0.0
      %1316 = vmatprep.subr.mxu0 0.0
      %1317 = vmatpush1.msra.mxu0 0.0
      %1318 = vmatprep.subr.mxu0 0.0
      %1319 = vmatpush1.msra.mxu0 0.0
      %1320 = vmatprep.subr.mxu0 0.0
      %1321 = vmatpush1.msra.mxu0 0.0
      %1322 = vmatprep.mubr.f32.mxu0 0.0
      %1323 = vmatmul.mubr.f32.gmra.mrb[0].mxu0 %v1179
      %v1324 = vpop.f32.mrb[0].mxu0
      %v1325 = vadd.f32 0.0, %v1324
      %v1326 = vpop.f32.mrb[0].mxu0
      %v1327 = vadd.f32 0.0, %v1326
      %1328 = vdwg.mxu0
      %v1329 = vadd.f32 %v1183, %v1254
      %v1330 = vadd.f32 %v1184, %v1256
      %v1331 = vadd.f32 %v1185, %v1325
      %v1332 = vadd.f32 %v1186, %v1327
      %v1333 = vxor.u32 %v1329, 2147483648
      %v1334 = vxor.u32 %v1330, 2147483648
      %v1335 = vxor.u32 %v1331, 2147483648
      %v1336 = vmul.f32 %v1333, 1.442695
      %v1337 = vpow.pop %v1336
      %v1338 = vmul.f32 %v1334, 1.442695
      %v1339 = vpow.pop %v1338
      %v1340 = vmul.f32 %v1335, 1.442695
      %v1341 = vpow.pop %v1340
      %v1342 = vadd.f32 %v1337, 1.0
      %v1343 = vadd.f32 %v1339, 1.0
      %v1344 = vadd.f32 %v1341, 1.0
      %v1345 = vrcp.pop %v1342
      %v1346 = vmul.f32 1.0, %v1345
      %v1347 = vrcp.pop %v1343
      %v1348 = vmul.f32 1.0, %v1347
      %v1349 = vrcp.pop %v1344
      %v1350 = vmul.f32 1.0, %v1349
      %v1351 = vtanh.pop %v1332
      %v1352 = vmul.f32 %v1348, %v1177
      %v1353 = vmul.f32 %v1346, %v1351
      %v1354 = vadd.f32 %v1352, %v1353
      %v1355 = vtanh.pop %v1354
      %v1356 = vmul.f32 %v1350, %v1355
      %s1357 = scalar_lea.vmem [#allocation3], 32
      %1358 = vst [vmem:[%s1357] sm:$0xff] %v1356
      %s1359 = scalar_lea.vmem [#allocation2], 160
      %v1360 = vld [vmem:[%s1359] sm:$0xff]
      %v1361 = vld [vmem:[%s1359 + $0x8] sm:$0xff]
      %v1362 = vld [vmem:[%s1359 + $0x10] sm:$0xff]
      %v1363 = vld [vmem:[%s1359 + $0x18] sm:$0xff]
      %1364 = vmatprep.subr.mxu0 %v413
      %1365 = vmatpush1.msra.mxu0 %v412
      %1366 = vmatprep.subr.mxu0 %v417
      %1367 = vmatpush1.msra.mxu0 %v416
      %1368 = vmatprep.subr.mxu0 %v421
      %1369 = vmatpush1.msra.mxu0 %v420
      %1370 = vmatprep.subr.mxu0 %v425
      %1371 = vmatpush1.msra.mxu0 %v424
      %1372 = vmatprep.subr.mxu0 %v429
      %1373 = vmatpush1.msra.mxu0 %v428
      %1374 = vmatprep.subr.mxu0 %v433
      %1375 = vmatpush1.msra.mxu0 %v432
      %1376 = vmatprep.subr.mxu0 %v437
      %1377 = vmatpush1.msra.mxu0 %v436
      %1378 = vmatprep.subr.mxu0 %v441
      %1379 = vmatpush1.msra.mxu0 %v440
      %1380 = vmatprep.subr.mxu0 %v445
      %1381 = vmatpush1.msra.mxu0 %v444
      %1382 = vmatprep.subr.mxu0 %v449
      %1383 = vmatpush1.msra.mxu0 %v448
      %1384 = vmatprep.subr.mxu0 %v453
      %1385 = vmatpush1.msra.mxu0 %v452
      %1386 = vmatprep.subr.mxu0 %v457
      %1387 = vmatpush1.msra.mxu0 %v456
      %1388 = vmatprep.subr.mxu0 %v461
      %1389 = vmatpush1.msra.mxu0 %v460
      %1390 = vmatprep.subr.mxu0 %v465
      %1391 = vmatpush1.msra.mxu0 %v464
      %1392 = vmatprep.subr.mxu0 %v469
      %1393 = vmatpush1.msra.mxu0 %v468
      %1394 = vmatprep.subr.mxu0 %v473
      %1395 = vmatpush1.msra.mxu0 %v472
      %1396 = vmatprep.subr.mxu0 0.0
      %1397 = vmatpush1.msra.mxu0 0.0
      %1398 = vmatprep.subr.mxu0 0.0
      %1399 = vmatpush1.msra.mxu0 0.0
      %1400 = vmatprep.subr.mxu0 0.0
      %1401 = vmatpush1.msra.mxu0 0.0
      %1402 = vmatprep.subr.mxu0 0.0
      %1403 = vmatpush1.msra.mxu0 0.0
      %1404 = vmatprep.subr.mxu0 0.0
      %1405 = vmatpush1.msra.mxu0 0.0
      %1406 = vmatprep.subr.mxu0 0.0
      %1407 = vmatpush1.msra.mxu0 0.0
      %1408 = vmatprep.subr.mxu0 0.0
      %1409 = vmatpush1.msra.mxu0 0.0
      %1410 = vmatprep.subr.mxu0 0.0
      %1411 = vmatpush1.msra.mxu0 0.0
      %1412 = vmatprep.subr.mxu0 0.0
      %1413 = vmatpush1.msra.mxu0 0.0
      %1414 = vmatprep.subr.mxu0 0.0
      %1415 = vmatpush1.msra.mxu0 0.0
      %1416 = vmatprep.subr.mxu0 0.0
      %1417 = vmatpush1.msra.mxu0 0.0
      %1418 = vmatprep.subr.mxu0 0.0
      %1419 = vmatpush1.msra.mxu0 0.0
      %1420 = vmatprep.subr.mxu0 0.0
      %1421 = vmatpush1.msra.mxu0 0.0
      %1422 = vmatprep.subr.mxu0 0.0
      %1423 = vmatpush1.msra.mxu0 0.0
      %1424 = vmatprep.subr.mxu0 0.0
      %1425 = vmatpush1.msra.mxu0 0.0
      %1426 = vmatprep.subr.mxu0 0.0
      %1427 = vmatpush1.msra.mxu0 0.0
      %1428 = vmatprep.mubr.f32.mxu0 0.0
      %1429 = vmatmul.mubr.f32.gmra.mrb[0].mxu0 %v1356
      %v1430 = vpop.f32.mrb[0].mxu0
      %v1431 = vadd.f32 0.0, %v1430
      %v1432 = vpop.f32.mrb[0].mxu0
      %v1433 = vadd.f32 0.0, %v1432
      %1434 = vdwg.mxu0
      %1435 = vmatprep.subr.mxu0 %v415
      %1436 = vmatpush1.msra.mxu0 %v414
      %1437 = vmatprep.subr.mxu0 %v419
      %1438 = vmatpush1.msra.mxu0 %v418
      %1439 = vmatprep.subr.mxu0 %v423
      %1440 = vmatpush1.msra.mxu0 %v422
      %1441 = vmatprep.subr.mxu0 %v427
      %1442 = vmatpush1.msra.mxu0 %v426
      %1443 = vmatprep.subr.mxu0 %v431
      %1444 = vmatpush1.msra.mxu0 %v430
      %1445 = vmatprep.subr.mxu0 %v435
      %1446 = vmatpush1.msra.mxu0 %v434
      %1447 = vmatprep.subr.mxu0 %v439
      %1448 = vmatpush1.msra.mxu0 %v438
      %1449 = vmatprep.subr.mxu0 %v443
      %1450 = vmatpush1.msra.mxu0 %v442
      %1451 = vmatprep.subr.mxu0 %v447
      %1452 = vmatpush1.msra.mxu0 %v446
      %1453 = vmatprep.subr.mxu0 %v451
      %1454 = vmatpush1.msra.mxu0 %v450
      %1455 = vmatprep.subr.mxu0 %v455
      %1456 = vmatpush1.msra.mxu0 %v454
      %1457 = vmatprep.subr.mxu0 %v459
      %1458 = vmatpush1.msra.mxu0 %v458
      %1459 = vmatprep.subr.mxu0 %v463
      %1460 = vmatpush1.msra.mxu0 %v462
      %1461 = vmatprep.subr.mxu0 %v467
      %1462 = vmatpush1.msra.mxu0 %v466
      %1463 = vmatprep.subr.mxu0 %v471
      %1464 = vmatpush1.msra.mxu0 %v470
      %1465 = vmatprep.subr.mxu0 %v475
      %1466 = vmatpush1.msra.mxu0 %v474
      %1467 = vmatprep.subr.mxu0 0.0
      %1468 = vmatpush1.msra.mxu0 0.0
      %1469 = vmatprep.subr.mxu0 0.0
      %1470 = vmatpush1.msra.mxu0 0.0
      %1471 = vmatprep.subr.mxu0 0.0
      %1472 = vmatpush1.msra.mxu0 0.0
      %1473 = vmatprep.subr.mxu0 0.0
      %1474 = vmatpush1.msra.mxu0 0.0
      %1475 = vmatprep.subr.mxu0 0.0
      %1476 = vmatpush1.msra.mxu0 0.0
      %1477 = vmatprep.subr.mxu0 0.0
      %1478 = vmatpush1.msra.mxu0 0.0
      %1479 = vmatprep.subr.mxu0 0.0
      %1480 = vmatpush1.msra.mxu0 0.0
      %1481 = vmatprep.subr.mxu0 0.0
      %1482 = vmatpush1.msra.mxu0 0.0
      %1483 = vmatprep.subr.mxu0 0.0
      %1484 = vmatpush1.msra.mxu0 0.0
      %1485 = vmatprep.subr.mxu0 0.0
      %1486 = vmatpush1.msra.mxu0 0.0
      %1487 = vmatprep.subr.mxu0 0.0
      %1488 = vmatpush1.msra.mxu0 0.0
      %1489 = vmatprep.subr.mxu0 0.0
      %1490 = vmatpush1.msra.mxu0 0.0
      %1491 = vmatprep.subr.mxu0 0.0
      %1492 = vmatpush1.msra.mxu0 0.0
      %1493 = vmatprep.subr.mxu0 0.0
      %1494 = vmatpush1.msra.mxu0 0.0
      %1495 = vmatprep.subr.mxu0 0.0
      %1496 = vmatpush1.msra.mxu0 0.0
      %1497 = vmatprep.subr.mxu0 0.0
      %1498 = vmatpush1.msra.mxu0 0.0
      %1499 = vmatprep.mubr.f32.mxu0 0.0
      %1500 = vmatmul.mubr.f32.gmra.mrb[0].mxu0 %v1356
      %v1501 = vpop.f32.mrb[0].mxu0
      %v1502 = vadd.f32 0.0, %v1501
      %v1503 = vpop.f32.mrb[0].mxu0
      %v1504 = vadd.f32 0.0, %v1503
      %1505 = vdwg.mxu0
      %v1506 = vadd.f32 %v1360, %v1431
      %v1507 = vadd.f32 %v1361, %v1433
      %v1508 = vadd.f32 %v1362, %v1502
      %v1509 = vadd.f32 %v1363, %v1504
      %v1510 = vxor.u32 %v1506, 2147483648
      %v1511 = vxor.u32 %v1507, 2147483648
      %v1512 = vxor.u32 %v1508, 2147483648
      %v1513 = vmul.f32 %v1510, 1.442695
      %v1514 = vpow.pop %v1513
      %v1515 = vmul.f32 %v1511, 1.442695
      %v1516 = vpow.pop %v1515
      %v1517 = vmul.f32 %v1512, 1.442695
      %v1518 = vpow.pop %v1517
      %v1519 = vadd.f32 %v1514, 1.0
      %v1520 = vadd.f32 %v1516, 1.0
      %v1521 = vadd.f32 %v1518, 1.0
      %v1522 = vrcp.pop %v1519
      %v1523 = vmul.f32 1.0, %v1522
      %v1524 = vrcp.pop %v1520
      %v1525 = vmul.f32 1.0, %v1524
      %v1526 = vrcp.pop %v1521
      %v1527 = vmul.f32 1.0, %v1526
      %v1528 = vtanh.pop %v1509
      %v1529 = vmul.f32 %v1525, %v1354
      %v1530 = vmul.f32 %v1523, %v1528
      %v1531 = vadd.f32 %v1529, %v1530
      %v1532 = vtanh.pop %v1531
      %v1533 = vmul.f32 %v1527, %v1532
      %s1534 = scalar_lea.vmem [#allocation3], 40
      %1535 = vst [vmem:[%s1534] sm:$0xff] %v1533
      %s1536 = scalar_lea.vmem [#allocation2], 192
      %v1537 = vld [vmem:[%s1536] sm:$0xff]
      %v1538 = vld [vmem:[%s1536 + $0x8] sm:$0xff]
      %v1539 = vld [vmem:[%s1536 + $0x10] sm:$0xff]
      %v1540 = vld [vmem:[%s1536 + $0x18] sm:$0xff]
      %1541 = vmatprep.subr.mxu0 %v413
      %1542 = vmatpush1.msra.mxu0 %v412
      %1543 = vmatprep.subr.mxu0 %v417
      %1544 = vmatpush1.msra.mxu0 %v416
      %1545 = vmatprep.subr.mxu0 %v421
      %1546 = vmatpush1.msra.mxu0 %v420
      %1547 = vmatprep.subr.mxu0 %v425
      %1548 = vmatpush1.msra.mxu0 %v424
      %1549 = vmatprep.subr.mxu0 %v429
      %1550 = vmatpush1.msra.mxu0 %v428
      %1551 = vmatprep.subr.mxu0 %v433
      %1552 = vmatpush1.msra.mxu0 %v432
      %1553 = vmatprep.subr.mxu0 %v437
      %1554 = vmatpush1.msra.mxu0 %v436
      %1555 = vmatprep.subr.mxu0 %v441
      %1556 = vmatpush1.msra.mxu0 %v440
      %1557 = vmatprep.subr.mxu0 %v445
      %1558 = vmatpush1.msra.mxu0 %v444
      %1559 = vmatprep.subr.mxu0 %v449
      %1560 = vmatpush1.msra.mxu0 %v448
      %1561 = vmatprep.subr.mxu0 %v453
      %1562 = vmatpush1.msra.mxu0 %v452
      %1563 = vmatprep.subr.mxu0 %v457
      %1564 = vmatpush1.msra.mxu0 %v456
      %1565 = vmatprep.subr.mxu0 %v461
      %1566 = vmatpush1.msra.mxu0 %v460
      %1567 = vmatprep.subr.mxu0 %v465
      %1568 = vmatpush1.msra.mxu0 %v464
      %1569 = vmatprep.subr.mxu0 %v469
      %1570 = vmatpush1.msra.mxu0 %v468
      %1571 = vmatprep.subr.mxu0 %v473
      %1572 = vmatpush1.msra.mxu0 %v472
      %1573 = vmatprep.subr.mxu0 0.0
      %1574 = vmatpush1.msra.mxu0 0.0
      %1575 = vmatprep.subr.mxu0 0.0
      %1576 = vmatpush1.msra.mxu0 0.0
      %1577 = vmatprep.subr.mxu0 0.0
      %1578 = vmatpush1.msra.mxu0 0.0
      %1579 = vmatprep.subr.mxu0 0.0
      %1580 = vmatpush1.msra.mxu0 0.0
      %1581 = vmatprep.subr.mxu0 0.0
      %1582 = vmatpush1.msra.mxu0 0.0
      %1583 = vmatprep.subr.mxu0 0.0
      %1584 = vmatpush1.msra.mxu0 0.0
      %1585 = vmatprep.subr.mxu0 0.0
      %1586 = vmatpush1.msra.mxu0 0.0
      %1587 = vmatprep.subr.mxu0 0.0
      %1588 = vmatpush1.msra.mxu0 0.0
      %1589 = vmatprep.subr.mxu0 0.0
      %1590 = vmatpush1.msra.mxu0 0.0
      %1591 = vmatprep.subr.mxu0 0.0
      %1592 = vmatpush1.msra.mxu0 0.0
      %1593 = vmatprep.subr.mxu0 0.0
      %1594 = vmatpush1.msra.mxu0 0.0
      %1595 = vmatprep.subr.mxu0 0.0
      %1596 = vmatpush1.msra.mxu0 0.0
      %1597 = vmatprep.subr.mxu0 0.0
      %1598 = vmatpush1.msra.mxu0 0.0
      %1599 = vmatprep.subr.mxu0 0.0
      %1600 = vmatpush1.msra.mxu0 0.0
      %1601 = vmatprep.subr.mxu0 0.0
      %1602 = vmatpush1.msra.mxu0 0.0
      %1603 = vmatprep.subr.mxu0 0.0
      %1604 = vmatpush1.msra.mxu0 0.0
      %1605 = vmatprep.mubr.f32.mxu0 0.0
      %1606 = vmatmul.mubr.f32.gmra.mrb[0].mxu0 %v1533
      %v1607 = vpop.f32.mrb[0].mxu0
      %v1608 = vadd.f32 0.0, %v1607
      %v1609 = vpop.f32.mrb[0].mxu0
      %v1610 = vadd.f32 0.0, %v1609
      %1611 = vdwg.mxu0
      %1612 = vmatprep.subr.mxu0 %v415
      %1613 = vmatpush1.msra.mxu0 %v414
      %1614 = vmatprep.subr.mxu0 %v419
      %1615 = vmatpush1.msra.mxu0 %v418
      %1616 = vmatprep.subr.mxu0 %v423
      %1617 = vmatpush1.msra.mxu0 %v422
      %1618 = vmatprep.subr.mxu0 %v427
      %1619 = vmatpush1.msra.mxu0 %v426
      %1620 = vmatprep.subr.mxu0 %v431
      %1621 = vmatpush1.msra.mxu0 %v430
      %1622 = vmatprep.subr.mxu0 %v435
      %1623 = vmatpush1.msra.mxu0 %v434
      %1624 = vmatprep.subr.mxu0 %v439
      %1625 = vmatpush1.msra.mxu0 %v438
      %1626 = vmatprep.subr.mxu0 %v443
      %1627 = vmatpush1.msra.mxu0 %v442
      %1628 = vmatprep.subr.mxu0 %v447
      %1629 = vmatpush1.msra.mxu0 %v446
      %1630 = vmatprep.subr.mxu0 %v451
      %1631 = vmatpush1.msra.mxu0 %v450
      %1632 = vmatprep.subr.mxu0 %v455
      %1633 = vmatpush1.msra.mxu0 %v454
      %1634 = vmatprep.subr.mxu0 %v459
      %1635 = vmatpush1.msra.mxu0 %v458
      %1636 = vmatprep.subr.mxu0 %v463
      %1637 = vmatpush1.msra.mxu0 %v462
      %1638 = vmatprep.subr.mxu0 %v467
      %1639 = vmatpush1.msra.mxu0 %v466
      %1640 = vmatprep.subr.mxu0 %v471
      %1641 = vmatpush1.msra.mxu0 %v470
      %1642 = vmatprep.subr.mxu0 %v475
      %1643 = vmatpush1.msra.mxu0 %v474
      %1644 = vmatprep.subr.mxu0 0.0
      %1645 = vmatpush1.msra.mxu0 0.0
      %1646 = vmatprep.subr.mxu0 0.0
      %1647 = vmatpush1.msra.mxu0 0.0
      %1648 = vmatprep.subr.mxu0 0.0
      %1649 = vmatpush1.msra.mxu0 0.0
      %1650 = vmatprep.subr.mxu0 0.0
      %1651 = vmatpush1.msra.mxu0 0.0
      %1652 = vmatprep.subr.mxu0 0.0
      %1653 = vmatpush1.msra.mxu0 0.0
      %1654 = vmatprep.subr.mxu0 0.0
      %1655 = vmatpush1.msra.mxu0 0.0
      %1656 = vmatprep.subr.mxu0 0.0
      %1657 = vmatpush1.msra.mxu0 0.0
      %1658 = vmatprep.subr.mxu0 0.0
      %1659 = vmatpush1.msra.mxu0 0.0
      %1660 = vmatprep.subr.mxu0 0.0
      %1661 = vmatpush1.msra.mxu0 0.0
      %1662 = vmatprep.subr.mxu0 0.0
      %1663 = vmatpush1.msra.mxu0 0.0
      %1664 = vmatprep.subr.mxu0 0.0
      %1665 = vmatpush1.msra.mxu0 0.0
      %1666 = vmatprep.subr.mxu0 0.0
      %1667 = vmatpush1.msra.mxu0 0.0
      %1668 = vmatprep.subr.mxu0 0.0
      %1669 = vmatpush1.msra.mxu0 0.0
      %1670 = vmatprep.subr.mxu0 0.0
      %1671 = vmatpush1.msra.mxu0 0.0
      %1672 = vmatprep.subr.mxu0 0.0
      %1673 = vmatpush1.msra.mxu0 0.0
      %1674 = vmatprep.subr.mxu0 0.0
      %1675 = vmatpush1.msra.mxu0 0.0
      %1676 = vmatprep.mubr.f32.mxu0 0.0
      %1677 = vmatmul.mubr.f32.gmra.mrb[0].mxu0 %v1533
      %v1678 = vpop.f32.mrb[0].mxu0
      %v1679 = vadd.f32 0.0, %v1678
      %v1680 = vpop.f32.mrb[0].mxu0
      %v1681 = vadd.f32 0.0, %v1680
      %1682 = vdwg.mxu0
      %v1683 = vadd.f32 %v1537, %v1608
      %v1684 = vadd.f32 %v1538, %v1610
      %v1685 = vadd.f32 %v1539, %v1679
      %v1686 = vadd.f32 %v1540, %v1681
      %v1687 = vxor.u32 %v1683, 2147483648
      %v1688 = vxor.u32 %v1684, 2147483648
      %v1689 = vxor.u32 %v1685, 2147483648
      %v1690 = vmul.f32 %v1687, 1.442695
      %v1691 = vpow.pop %v1690
      %v1692 = vmul.f32 %v1688, 1.442695
      %v1693 = vpow.pop %v1692
      %v1694 = vmul.f32 %v1689, 1.442695
      %v1695 = vpow.pop %v1694
      %v1696 = vadd.f32 %v1691, 1.0
      %v1697 = vadd.f32 %v1693, 1.0
      %v1698 = vadd.f32 %v1695, 1.0
      %v1699 = vrcp.pop %v1696
      %v1700 = vmul.f32 1.0, %v1699
      %v1701 = vrcp.pop %v1697
      %v1702 = vmul.f32 1.0, %v1701
      %v1703 = vrcp.pop %v1698
      %v1704 = vmul.f32 1.0, %v1703
      %v1705 = vtanh.pop %v1686
      %v1706 = vmul.f32 %v1702, %v1531
      %v1707 = vmul.f32 %v1700, %v1705
      %v1708 = vadd.f32 %v1706, %v1707
      %v1709 = vtanh.pop %v1708
      %v1710 = vmul.f32 %v1704, %v1709
      %s1711 = scalar_lea.vmem [#allocation3], 48
      %1712 = vst [vmem:[%s1711] sm:$0xff] %v1710
      %s1713 = scalar_lea.vmem [#allocation2], 224
      %v1714 = vld [vmem:[%s1713] sm:$0xff]
      %v1715 = vld [vmem:[%s1713 + $0x8] sm:$0xff]
      %v1716 = vld [vmem:[%s1713 + $0x10] sm:$0xff]
      %v1717 = vld [vmem:[%s1713 + $0x18] sm:$0xff]
      %1718 = vmatprep.subr.mxu0 %v413
      %1719 = vmatpush1.msra.mxu0 %v412
      %1720 = vmatprep.subr.mxu0 %v417
      %1721 = vmatpush1.msra.mxu0 %v416
      %1722 = vmatprep.subr.mxu0 %v421
      %1723 = vmatpush1.msra.mxu0 %v420
      %1724 = vmatprep.subr.mxu0 %v425
      %1725 = vmatpush1.msra.mxu0 %v424
      %1726 = vmatprep.subr.mxu0 %v429
      %1727 = vmatpush1.msra.mxu0 %v428
      %1728 = vmatprep.subr.mxu0 %v433
      %1729 = vmatpush1.msra.mxu0 %v432
      %1730 = vmatprep.subr.mxu0 %v437
      %1731 = vmatpush1.msra.mxu0 %v436
      %1732 = vmatprep.subr.mxu0 %v441
      %1733 = vmatpush1.msra.mxu0 %v440
      %1734 = vmatprep.subr.mxu0 %v445
      %1735 = vmatpush1.msra.mxu0 %v444
      %1736 = vmatprep.subr.mxu0 %v449
      %1737 = vmatpush1.msra.mxu0 %v448
      %1738 = vmatprep.subr.mxu0 %v453
      %1739 = vmatpush1.msra.mxu0 %v452
      %1740 = vmatprep.subr.mxu0 %v457
      %1741 = vmatpush1.msra.mxu0 %v456
      %1742 = vmatprep.subr.mxu0 %v461
      %1743 = vmatpush1.msra.mxu0 %v460
      %1744 = vmatprep.subr.mxu0 %v465
      %1745 = vmatpush1.msra.mxu0 %v464
      %1746 = vmatprep.subr.mxu0 %v469
      %1747 = vmatpush1.msra.mxu0 %v468
      %1748 = vmatprep.subr.mxu0 %v473
      %1749 = vmatpush1.msra.mxu0 %v472
      %1750 = vmatprep.subr.mxu0 0.0
      %1751 = vmatpush1.msra.mxu0 0.0
      %1752 = vmatprep.subr.mxu0 0.0
      %1753 = vmatpush1.msra.mxu0 0.0
      %1754 = vmatprep.subr.mxu0 0.0
      %1755 = vmatpush1.msra.mxu0 0.0
      %1756 = vmatprep.subr.mxu0 0.0
      %1757 = vmatpush1.msra.mxu0 0.0
      %1758 = vmatprep.subr.mxu0 0.0
      %1759 = vmatpush1.msra.mxu0 0.0
      %1760 = vmatprep.subr.mxu0 0.0
      %1761 = vmatpush1.msra.mxu0 0.0
      %1762 = vmatprep.subr.mxu0 0.0
      %1763 = vmatpush1.msra.mxu0 0.0
      %1764 = vmatprep.subr.mxu0 0.0
      %1765 = vmatpush1.msra.mxu0 0.0
      %1766 = vmatprep.subr.mxu0 0.0
      %1767 = vmatpush1.msra.mxu0 0.0
      %1768 = vmatprep.subr.mxu0 0.0
      %1769 = vmatpush1.msra.mxu0 0.0
      %1770 = vmatprep.subr.mxu0 0.0
      %1771 = vmatpush1.msra.mxu0 0.0
      %1772 = vmatprep.subr.mxu0 0.0
      %1773 = vmatpush1.msra.mxu0 0.0
      %1774 = vmatprep.subr.mxu0 0.0
      %1775 = vmatpush1.msra.mxu0 0.0
      %1776 = vmatprep.subr.mxu0 0.0
      %1777 = vmatpush1.msra.mxu0 0.0
      %1778 = vmatprep.subr.mxu0 0.0
      %1779 = vmatpush1.msra.mxu0 0.0
      %1780 = vmatprep.subr.mxu0 0.0
      %1781 = vmatpush1.msra.mxu0 0.0
      %1782 = vmatprep.mubr.f32.mxu0 0.0
      %1783 = vmatmul.mubr.f32.gmra.mrb[0].mxu0 %v1710
      %v1784 = vpop.f32.mrb[0].mxu0
      %v1785 = vadd.f32 0.0, %v1784
      %v1786 = vpop.f32.mrb[0].mxu0
      %v1787 = vadd.f32 0.0, %v1786
      %1788 = vdwg.mxu0
      %1789 = vmatprep.subr.mxu0 %v415
      %1790 = vmatpush1.msra.mxu0 %v414
      %1791 = vmatprep.subr.mxu0 %v419
      %1792 = vmatpush1.msra.mxu0 %v418
      %1793 = vmatprep.subr.mxu0 %v423
      %1794 = vmatpush1.msra.mxu0 %v422
      %1795 = vmatprep.subr.mxu0 %v427
      %1796 = vmatpush1.msra.mxu0 %v426
      %1797 = vmatprep.subr.mxu0 %v431
      %1798 = vmatpush1.msra.mxu0 %v430
      %1799 = vmatprep.subr.mxu0 %v435
      %1800 = vmatpush1.msra.mxu0 %v434
      %1801 = vmatprep.subr.mxu0 %v439
      %1802 = vmatpush1.msra.mxu0 %v438
      %1803 = vmatprep.subr.mxu0 %v443
      %1804 = vmatpush1.msra.mxu0 %v442
      %1805 = vmatprep.subr.mxu0 %v447
      %1806 = vmatpush1.msra.mxu0 %v446
      %1807 = vmatprep.subr.mxu0 %v451
      %1808 = vmatpush1.msra.mxu0 %v450
      %1809 = vmatprep.subr.mxu0 %v455
      %1810 = vmatpush1.msra.mxu0 %v454
      %1811 = vmatprep.subr.mxu0 %v459
      %1812 = vmatpush1.msra.mxu0 %v458
      %1813 = vmatprep.subr.mxu0 %v463
      %1814 = vmatpush1.msra.mxu0 %v462
      %1815 = vmatprep.subr.mxu0 %v467
      %1816 = vmatpush1.msra.mxu0 %v466
      %1817 = vmatprep.subr.mxu0 %v471
      %1818 = vmatpush1.msra.mxu0 %v470
      %1819 = vmatprep.subr.mxu0 %v475
      %1820 = vmatpush1.msra.mxu0 %v474
      %1821 = vmatprep.subr.mxu0 0.0
      %1822 = vmatpush1.msra.mxu0 0.0
      %1823 = vmatprep.subr.mxu0 0.0
      %1824 = vmatpush1.msra.mxu0 0.0
      %1825 = vmatprep.subr.mxu0 0.0
      %1826 = vmatpush1.msra.mxu0 0.0
      %1827 = vmatprep.subr.mxu0 0.0
      %1828 = vmatpush1.msra.mxu0 0.0
      %1829 = vmatprep.subr.mxu0 0.0
      %1830 = vmatpush1.msra.mxu0 0.0
      %1831 = vmatprep.subr.mxu0 0.0
      %1832 = vmatpush1.msra.mxu0 0.0
      %1833 = vmatprep.subr.mxu0 0.0
      %1834 = vmatpush1.msra.mxu0 0.0
      %1835 = vmatprep.subr.mxu0 0.0
      %1836 = vmatpush1.msra.mxu0 0.0
      %1837 = vmatprep.subr.mxu0 0.0
      %1838 = vmatpush1.msra.mxu0 0.0
      %1839 = vmatprep.subr.mxu0 0.0
      %1840 = vmatpush1.msra.mxu0 0.0
      %1841 = vmatprep.subr.mxu0 0.0
      %1842 = vmatpush1.msra.mxu0 0.0
      %1843 = vmatprep.subr.mxu0 0.0
      %1844 = vmatpush1.msra.mxu0 0.0
      %1845 = vmatprep.subr.mxu0 0.0
      %1846 = vmatpush1.msra.mxu0 0.0
      %1847 = vmatprep.subr.mxu0 0.0
      %1848 = vmatpush1.msra.mxu0 0.0
      %1849 = vmatprep.subr.mxu0 0.0
      %1850 = vmatpush1.msra.mxu0 0.0
      %1851 = vmatprep.subr.mxu0 0.0
      %1852 = vmatpush1.msra.mxu0 0.0
      %1853 = vmatprep.mubr.f32.mxu0 0.0
      %1854 = vmatmul.mubr.f32.gmra.mrb[0].mxu0 %v1710
      %v1855 = vpop.f32.mrb[0].mxu0
      %v1856 = vadd.f32 0.0, %v1855
      %v1857 = vpop.f32.mrb[0].mxu0
      %v1858 = vadd.f32 0.0, %v1857
      %1859 = vdwg.mxu0
      %v1860 = vadd.f32 %v1714, %v1785
      %v1861 = vadd.f32 %v1715, %v1787
      %v1862 = vadd.f32 %v1716, %v1856
      %v1863 = vadd.f32 %v1717, %v1858
      %v1864 = vxor.u32 %v1860, 2147483648
      %v1865 = vxor.u32 %v1861, 2147483648
      %v1866 = vxor.u32 %v1862, 2147483648
      %v1867 = vmul.f32 %v1864, 1.442695
      %v1868 = vpow.pop %v1867
      %v1869 = vmul.f32 %v1865, 1.442695
      %v1870 = vpow.pop %v1869
      %v1871 = vmul.f32 %v1866, 1.442695
      %v1872 = vpow.pop %v1871
      %v1873 = vadd.f32 %v1868, 1.0
      %v1874 = vadd.f32 %v1870, 1.0
      %v1875 = vadd.f32 %v1872, 1.0
      %v1876 = vrcp.pop %v1873
      %v1877 = vmul.f32 1.0, %v1876
      %v1878 = vrcp.pop %v1874
      %v1879 = vmul.f32 1.0, %v1878
      %v1880 = vrcp.pop %v1875
      %v1881 = vmul.f32 1.0, %v1880
      %v1882 = vtanh.pop %v1863
      %v1883 = vmul.f32 %v1879, %v1708
      %v1884 = vmul.f32 %v1877, %v1882
      %v1885 = vadd.f32 %v1883, %v1884
      %v1886 = vtanh.pop %v1885
      %v1887 = vmul.f32 %v1881, %v1886
      %s1888 = scalar_lea.vmem [#allocation3], 56
      %1889 = vst [vmem:[%s1888] sm:$0xff] %v1887
    $region45: #{tpu_custom_call.1} parent=1 // pred_fallthru
      _
    %v1890 = vld [vmem:[#allocation3] sm:$0xff]
    %v1891 = vld [vmem:[#allocation3 + $0x8] sm:$0xff]
    %v1892 = vld [vmem:[#allocation3 + $0x10] sm:$0xff]
    %v1893 = vld [vmem:[#allocation3 + $0x18] sm:$0xff]
    %v1894 = vld [vmem:[#allocation3 + $0x20] sm:$0xff]
    %v1895 = vld [vmem:[#allocation3 + $0x28] sm:$0xff]
    %v1896 = vld [vmem:[#allocation3 + $0x30] sm:$0xff]
    %v1897 = vld [vmem:[#allocation3 + $0x38] sm:$0xff]
    %v1898 = vld [vmem:[#allocation10] sm:$0xff]
    %v1899 = vld [vmem:[#allocation10 + $0x8] sm:$0xff]
    %v1900 = vld [vmem:[#allocation10 + $0x10] sm:$0xff]
    %v1901 = vld [vmem:[#allocation10 + $0x18] sm:$0xff]
    %v1902 = vld [vmem:[#allocation10 + $0x20] sm:$0xff]
    %v1903 = vld [vmem:[#allocation10 + $0x28] sm:$0xff]
    %v1904 = vld [vmem:[#allocation10 + $0x30] sm:$0xff]
    %v1905 = vld [vmem:[#allocation10 + $0x38] sm:$0xff]
    %v1906 = vld [vmem:[#allocation10 + $0x40] sm:$0xff]
    %v1907 = vld [vmem:[#allocation10 + $0x48] sm:$0xff]
    %v1908 = vld [vmem:[#allocation10 + $0x50] sm:$0xff]
    %v1909 = vld [vmem:[#allocation10 + $0x58] sm:$0xff]
    %v1910 = vld [vmem:[#allocation10 + $0x60] sm:$0xff]
    %v1911 = vld [vmem:[#allocation10 + $0x68] sm:$0xff]
    %v1912 = vld [vmem:[#allocation10 + $0x70] sm:$0xff]
    %v1913 = vld [vmem:[#allocation10 + $0x78] sm:$0xff]
    %v1914 = vld [vmem:[%s5] sm:$0x1]
    %v1916 = vlaneseq
    %v1917 = vshrl.u32 %v1916, 7
    %v1918 = vsub.s32 0, %v1917
    %v1919 = vrot.slane %v1914, %v1918
    %1921 = vmatprep.subr.mxu0 0.0
    %1922 = vmatpush1.msra.mxu0 %v1898
    %1923 = vmatprep.subr.mxu0 0.0
    %1924 = vmatpush1.msra.mxu0 %v1899
    %1925 = vmatprep.subr.mxu0 0.0
    %1926 = vmatpush1.msra.mxu0 %v1900
    %1927 = vmatprep.subr.mxu0 0.0
    %1928 = vmatpush1.msra.mxu0 %v1901
    %1929 = vmatprep.subr.mxu0 0.0
    %1930 = vmatpush1.msra.mxu0 %v1902
    %1931 = vmatprep.subr.mxu0 0.0
    %1932 = vmatpush1.msra.mxu0 %v1903
    %1933 = vmatprep.subr.mxu0 0.0
    %1934 = vmatpush1.msra.mxu0 %v1904
    %1935 = vmatprep.subr.mxu0 0.0
    %1936 = vmatpush1.msra.mxu0 %v1905
    %1937 = vmatprep.subr.mxu0 0.0
    %1938 = vmatpush1.msra.mxu0 %v1906
    %1939 = vmatprep.subr.mxu0 0.0
    %1940 = vmatpush1.msra.mxu0 %v1907
    %1941 = vmatprep.subr.mxu0 0.0
    %1942 = vmatpush1.msra.mxu0 %v1908
    %1943 = vmatprep.subr.mxu0 0.0
    %1944 = vmatpush1.msra.mxu0 %v1909
    %1945 = vmatprep.subr.mxu0 0.0
    %1946 = vmatpush1.msra.mxu0 %v1910
    %1947 = vmatprep.subr.mxu0 0.0
    %1948 = vmatpush1.msra.mxu0 %v1911
    %1949 = vmatprep.subr.mxu0 0.0
    %1950 = vmatpush1.msra.mxu0 %v1912
    %1951 = vmatprep.subr.mxu0 0.0
    %1952 = vmatpush1.msra.mxu0 %v1913
    %1953 = vmatprep.subr.mxu0 0.0
    %1954 = vmatpush1.msra.mxu0 0.0
    %1955 = vmatprep.subr.mxu0 0.0
    %1956 = vmatpush1.msra.mxu0 0.0
    %1957 = vmatprep.subr.mxu0 0.0
    %1958 = vmatpush1.msra.mxu0 0.0
    %1959 = vmatprep.subr.mxu0 0.0
    %1960 = vmatpush1.msra.mxu0 0.0
    %1961 = vmatprep.subr.mxu0 0.0
    %1962 = vmatpush1.msra.mxu0 0.0
    %1963 = vmatprep.subr.mxu0 0.0
    %1964 = vmatpush1.msra.mxu0 0.0
    %1965 = vmatprep.subr.mxu0 0.0
    %1966 = vmatpush1.msra.mxu0 0.0
    %1967 = vmatprep.subr.mxu0 0.0
    %1968 = vmatpush1.msra.mxu0 0.0
    %1969 = vmatprep.subr.mxu0 0.0
    %1970 = vmatpush1.msra.mxu0 0.0
    %1971 = vmatprep.subr.mxu0 0.0
    %1972 = vmatpush1.msra.mxu0 0.0
    %1973 = vmatprep.subr.mxu0 0.0
    %1974 = vmatpush1.msra.mxu0 0.0
    %1975 = vmatprep.subr.mxu0 0.0
    %1976 = vmatpush1.msra.mxu0 0.0
    %1977 = vmatprep.subr.mxu0 0.0
    %1978 = vmatpush1.msra.mxu0 0.0
    %1979 = vmatprep.subr.mxu0 0.0
    %1980 = vmatpush1.msra.mxu0 0.0
    %1981 = vmatprep.subr.mxu0 0.0
    %1982 = vmatpush1.msra.mxu0 0.0
    %1983 = vmatprep.subr.mxu0 0.0
    %1984 = vmatpush1.msra.mxu0 0.0
    %1985 = vmatprep.mubr.f32.mxu0 0.0
    %1986 = vmatmul.mubr.f32.gmra.mrb[0].mxu0 %v1890
    %v1987 = vpop.f32.mrb[0].mxu0
    %v1988 = vadd.f32 %v1919, %v1987
    %v1989 = vpop.f32.mrb[0].mxu0
    %1990 = vmatprep.mubr.f32.mxu0 0.0
    %1991 = vmatmul.mubr.f32.gmra.mrb[0].mxu0 %v1891
    %v1992 = vpop.f32.mrb[0].mxu0
    %v1993 = vadd.f32 %v1919, %v1992
    %v1994 = vpop.f32.mrb[0].mxu0
    %1995 = vmatprep.mubr.f32.mxu0 0.0
    %1996 = vmatmul.mubr.f32.gmra.mrb[0].mxu0 %v1892
    %v1997 = vpop.f32.mrb[0].mxu0
    %v1998 = vadd.f32 %v1919, %v1997
    %v1999 = vpop.f32.mrb[0].mxu0
    %2000 = vmatprep.mubr.f32.mxu0 0.0
    %2001 = vmatmul.mubr.f32.gmra.mrb[0].mxu0 %v1893
    %v2002 = vpop.f32.mrb[0].mxu0
    %v2003 = vadd.f32 %v1919, %v2002
    %v2004 = vpop.f32.mrb[0].mxu0
    %2005 = vmatprep.mubr.f32.mxu0 0.0
    %2006 = vmatmul.mubr.f32.gmra.mrb[0].mxu0 %v1894
    %v2007 = vpop.f32.mrb[0].mxu0
    %v2008 = vadd.f32 %v1919, %v2007
    %v2009 = vpop.f32.mrb[0].mxu0
    %2010 = vmatprep.mubr.f32.mxu0 0.0
    %2011 = vmatmul.mubr.f32.gmra.mrb[0].mxu0 %v1895
    %v2012 = vpop.f32.mrb[0].mxu0
    %v2013 = vadd.f32 %v1919, %v2012
    %v2014 = vpop.f32.mrb[0].mxu0
    %2015 = vmatprep.mubr.f32.mxu0 0.0
    %2016 = vmatmul.mubr.f32.gmra.mrb[0].mxu0 %v1896
    %v2017 = vpop.f32.mrb[0].mxu0
    %v2018 = vadd.f32 %v1919, %v2017
    %v2019 = vpop.f32.mrb[0].mxu0
    %2020 = vmatprep.mubr.f32.mxu0 0.0
    %2021 = vmatmul.mubr.f32.gmra.mrb[0].mxu0 %v1897
    %v2022 = vpop.f32.mrb[0].mxu0
    %v2023 = vadd.f32 %v1919, %v2022
    %v2024 = vpop.f32.mrb[0].mxu0
    %2025 = vdwg.mxu0
    %2026 = vst [vmem:[#allocation12] sm:$0xff] %v1988
    %2027 = vst [vmem:[#allocation12 + $0x8] sm:$0xff] %v1993
    %2028 = vst [vmem:[#allocation12 + $0x10] sm:$0xff] %v1998
    %2029 = vst [vmem:[#allocation12 + $0x18] sm:$0xff] %v2003
    %2030 = vst [vmem:[#allocation12 + $0x20] sm:$0xff] %v2008
    %2031 = vst [vmem:[#allocation12 + $0x28] sm:$0xff] %v2013
    %2032 = vst [vmem:[#allocation12 + $0x30] sm:$0xff] %v2018
    %2033 = vst [vmem:[#allocation12 + $0x38] sm:$0xff] %v2023
    // Predicated region
    $region46: #{tpu_custom_call.1} parent=1 // pred_check
      _
    $region47: #{tpu_custom_call.1} parent=1 // pred_check_branch
      %2035 = sbr.rel (0) target = $region49
    $region48: #{tpu_custom_call.1} parent=1 // pred_region
      %s2037 = ssub.s32 1024, 1024
      %2038 = vsyncadd [#allocation6], %s2037
      %s2039 = sshll.u32 [#allocation12], 4
      %s2040 = int_to_ptr.vmem [resolvable:$true] %s2039
      %2045 = dma.vmem_to_hbm [thread:$0]  %s2040, 1024, %s6, [#allocation6], 128, 128, 8
    $region49: #{tpu_custom_call.1} parent=1 // pred_fallthru
      _
    // Predicated region
    $region50: #{tpu_custom_call.1} parent=1 // pred_check
      _
    $region51: #{tpu_custom_call.1} parent=1 // pred_check_branch
      %2047 = sbr.rel (0) target = $region53
    $region52: #{tpu_custom_call.1} parent=1 // pred_region
      %2048 = dma.done [#allocation6], 1024
    $region53: #{tpu_custom_call.1} parent=1 // pred_fallthru
      _
    %2049 = vsyncpa [#allocation5], 1
    %2050 = vsyncpa [#allocation8], 1
    %2051 = vsyncpa [#allocation11], 1
    %2052 = vsyncpa [#allocation6], 1

</llo_original>
